<compile_context>
chip_gen: v7x
topology: tpu7x:2x2x1
jax: 0.10.0
libtpu: 0.0.40
codegen_flags: <defaults>
</compile_context>

<pallas_src>
import functools
import math

import jax
import jax.numpy as jnp
from jax.experimental import pallas as pl
from jax.experimental.pallas import tpu as pltpu

EPS = 1e-6
LEAKY_SLOPE = 0.2
_F32 = jnp.float32
_MIB = 1024 * 1024


def _round_up(x, m):
    return (x + m - 1) // m * m


def _vmem_capacity_bytes():
    try:
        return int(pltpu.get_tpu_info().vmem_capacity_bytes)
    except Exception:
        return 64 * _MIB          # conservative default = v7x per-TensorCore VMEM


def _vmem_limit(needed_bytes, capacity_bytes):
    limit = max(32 * _MIB, int(needed_bytes * 1.25))
    return int(min(capacity_bytes - 4 * _MIB, limit))


# ---------------------------------------------------------------------------
# Kernel 1: per-chunk weight prep.  For each layer of the chunk it reads the raw
# (N, K) W_hat / M_hat and (1, K) G once, computes the effective NAC weights,
# zero-pads and transposes them to (Kp, Np) via an aligned staging scratch, and
# writes the padded gate row.  One launch per chunk, one HBM read per parameter.
# ---------------------------------------------------------------------------
def _weights_prep_kernel(*refs, dims):
    n = len(dims)
    in_refs = refs[: 3 * n]
    out_refs = refs[3 * n: 3 * n + 2 * n]
    scratch_refs = refs[3 * n + 2 * n:]
    for l, (K, N, Kp, Np) in enumerate(dims):
        w_hat_ref = in_refs[3 * l]        # (N, K)
        m_hat_ref = in_refs[3 * l + 1]    # (N, K)
        g_ref = in_refs[3 * l + 2]        # (1, K)
        wt_ref = out_refs[2 * l]          # (Kp, Np) padded, transposed effective weights
        gp_ref = out_refs[2 * l + 1]      # (1, Kp)  padded gate row
        tmp = scratch_refs[l]             # (Np, Kp) aligned staging buffer

        w_eff = jnp.tanh(w_hat_ref[...]) * jax.nn.sigmoid(m_hat_ref[...])   # (N, K)
        tmp[...] = jnp.zeros_like(tmp)
        tmp[:N, :K] = w_eff
        wt_ref[...] = tmp[...].T          # aligned (Np,Kp)->(Kp,Np) transpose, done once

        gp_ref[...] = jnp.zeros_like(gp_ref)
        gp_ref[:, :K] = g_ref[...]


# ---------------------------------------------------------------------------
# Kernel 2: fused NALU stack over one batch tile.
#   refs = [x_ref, (wt_0, g_0), (wt_1, g_1), ..., o_ref]
#   x_ref : (tm, Kp_0)     batch tile (streamed over the grid)
#   wt_l  : (Kp_l, Np_l)   VMEM-resident effective weights (constant index_map)
#   g_l   : (1, Kp_l)      VMEM-resident gate row
#   o_ref : (tm, Np_last)  lane-dense output tile
# ---------------------------------------------------------------------------
def _nalu_stack_kernel(*refs, num_layers, act_flags, negative_slope, batch_rows, tm):
    x_ref = refs[0]
    o_ref = refs[1 + 2 * num_layers]

    i = pl.program_id(0)
    row_ids = i * tm + jax.lax.broadcasted_iota(jnp.int32, (tm, 1), 0)
    row_mask = row_ids < batch_rows           # keeps padded batch rows at zero

    h = x_ref[...].astype(_F32)
    for l in range(num_layers):
        wt = refs[1 + 2 * l][...]             # (Kp_l, Np_l) resident
        g_row = refs[2 + 2 * l][...]          # (1, Kp_l)    resident

        log_h = jnp.log(jnp.abs(h) + EPS)
        a = jnp.dot(h, wt, preferred_element_type=jnp.float32)                  # additive path
        m = jnp.exp(jnp.dot(log_h, wt, preferred_element_type=jnp.float32))     # log/exp path
        gate = jax.nn.sigmoid(jnp.sum(h * g_row, axis=-1, keepdims=True))       # (tm, 1)

        y = m + gate * (a - m)                # == gate*a + (1-gate)*m
        if act_flags[l]:
            y = jnp.where(y >= 0, y, negative_slope * y)
        h = jnp.where(row_mask, y, 0.0)       # zero padded rows -> no inf/NaN carried forward

    o_ref[...] = h.astype(o_ref.dtype)


# ---------------------------------------------------------------------------
# Wrapper
# ---------------------------------------------------------------------------
def n_layer_leaky_nac_forward(x, params, negative_slope=LEAKY_SLOPE):
    """x: (B, in_features); params: list of (W_hat (N,K), M_hat (N,K), G (1,K))."""
    B, K0 = x.shape
    nl = len(params)

    Ks, Ns = [], []
    for (w_hat, _m_hat, _g) in params:
        n_out, n_in = w_hat.shape
        Ks.append(n_in)
        Ns.append(n_out)
    assert Ks[0] == K0
    Kp = [_round_up(k, 128) for k in Ks]
    Np = [_round_up(n, 128) for n in Ns]

    # Batch tiling: tm is a multiple of 8, capped so large batches get several tiles
    # (lets v7x's two TensorCores both take work on the "parallel" grid axis).
    tm = min(_round_up(B, 8), 256)
    Bp = _round_up(B, tm)
    nb = Bp // tm

    cap = _vmem_capacity_bytes()
    # Chunk budget for resident weights: the prep kernel transiently holds raw params +
    # padded weights + staging scratch (+double buffers), the stack kernel holds the
    # resident weights (+double buffers) plus activation tiles.  ~6x weight bytes covers both.
    weight_budget = max(4 * _MIB, (cap - 16 * _MIB) // 6)

    # Greedy chunking of consecutive layers whose padded weights fit the budget.
    chunks, cur, cur_bytes = [], [], 0
    for l in range(nl):
        wb = (Kp[l] * Np[l] + Kp[l]) * 4
        if cur and cur_bytes + wb > weight_budget:
            chunks.append(cur)
            cur, cur_bytes = [], 0
        cur.append(l)
        cur_bytes += wb
    chunks.append(cur)
    # TODO(synk): a single layer whose weights alone exceed VMEM would need a K/N-streamed
    # variant of the stack kernel; not implemented (never hit at these model sizes).

    # Pad activations once; keep them padded between chunks; slice once at the very end.
    h_pad = jnp.zeros((Bp, Kp[0]), _F32).at[:B, :K0].set(x.astype(_F32))

    for chunk in chunks:
        n_c = len(chunk)
        first, last = chunk[0], chunk[-1]
        chunk_weight_bytes = sum((Kp[l] * Np[l] + Kp[l]) * 4 for l in chunk)
        chunk_raw_bytes = sum((2 * Ns[l] * Ks[l] + Ks[l]) * 4 for l in chunk)

        # ---- weight prep: raw (N,K) params -> padded transposed (Kp,Np) weights ----
        prep_in, prep_in_specs = [], []
        prep_out_shapes, prep_out_specs, prep_scratch, dims = [], [], [], []
        for l in chunk:
            w_hat, m_hat, g_vec = params[l]
            prep_in += [w_hat.astype(_F32), m_hat.astype(_F32), g_vec.astype(_F32)]
            prep_in_specs += [
                pl.BlockSpec((Ns[l], Ks[l]), lambda i: (0, 0)),
                pl.BlockSpec((Ns[l], Ks[l]), lambda i: (0, 0)),
                pl.BlockSpec((1, Ks[l]), lambda i: (0, 0)),
            ]
            prep_out_shapes += [jax.ShapeDtypeStruct((Kp[l], Np[l]), _F32),
                                jax.ShapeDtypeStruct((1, Kp[l]), _F32)]
            prep_out_specs += [pl.BlockSpec((Kp[l], Np[l]), lambda i: (0, 0)),
                               pl.BlockSpec((1, Kp[l]), lambda i: (0, 0))]
            prep_scratch.append(pltpu.VMEM((Np[l], Kp[l]), _F32))
            dims.append((Ks[l], Ns[l], Kp[l], Np[l]))

        prep_need = 2 * (chunk_raw_bytes + 2 * chunk_weight_bytes)
        prepped = pl.pallas_call(
            functools.partial(_weights_prep_kernel, dims=tuple(dims)),
            out_shape=tuple(prep_out_shapes),
            grid=(1,),
            in_specs=prep_in_specs,
            out_specs=tuple(prep_out_specs),
            scratch_shapes=prep_scratch,
            compiler_params=pltpu.CompilerParams(
                vmem_limit_bytes=_vmem_limit(prep_need, cap)),
        )(*prep_in)

        # ---- fused NALU stack over batch tiles, all chunk weights VMEM-resident ----
        stack_in = [h_pad]
        stack_specs = [pl.BlockSpec((tm, Kp[first]), lambda i: (i, 0))]
        for idx, l in enumerate(chunk):
            stack_in += [prepped[2 * idx], prepped[2 * idx + 1]]
            stack_specs += [pl.BlockSpec((Kp[l], Np[l]), lambda i: (0, 0)),   # resident
                            pl.BlockSpec((1, Kp[l]), lambda i: (0, 0))]       # resident

        act_flags = tuple(bool(l < nl - 1) for l in chunk)

        act_tile_bytes = tm * max(Np[l] for l in chunk) * 4
        stack_need = (2 * chunk_weight_bytes
                      + 4 * tm * (Kp[first] + Np[last]) * 4
                      + 8 * act_tile_bytes)
        flops = sum(4 * Bp * Kp[l] * Np[l] + 6 * Bp * Np[l] for l in chunk)
        transcendentals = sum(Bp * (Kp[l] + Np[l] + 1) for l in chunk)
        bytes_accessed = 4 * Bp * Kp[first] + chunk_weight_bytes + 4 * Bp * Np[last]

        h_pad = pl.pallas_call(
            functools.partial(_nalu_stack_kernel, num_layers=n_c, act_flags=act_flags,
                              negative_slope=negative_slope, batch_rows=B, tm=tm),
            out_shape=jax.ShapeDtypeStruct((Bp, Np[last]), _F32),
            grid=(nb,),
            in_specs=stack_specs,
            out_specs=pl.BlockSpec((tm, Np[last]), lambda i: (i, 0)),
            compiler_params=pltpu.CompilerParams(
                dimension_semantics=("parallel",),
                vmem_limit_bytes=_vmem_limit(stack_need, cap)),
            cost_estimate=pl.CostEstimate(
                flops=flops, transcendentals=transcendentals,
                bytes_accessed=bytes_accessed),
        )(*stack_in)

    return h_pad[:B, :Ns[-1]]


# ---------------------------------------------------------------------------
# Parameter init (matches torch.nn.init.kaiming_uniform_ defaults) & reference
# ---------------------------------------------------------------------------
def kaiming_uniform(key, shape):
    fan_in = shape[-1]
    bound = math.sqrt(6.0 / fan_in)
    return jax.random.uniform(key, shape, jnp.float32, -bound, bound)


def init_params(key, in_features, out_features, num_layers, hidden_dim=64):
    dims = [(in_features if l == 0 else hidden_dim, hidden_dim)
            for l in range(num_layers)]
    dims.append((hidden_dim, out_features))
    params = []
    for n_in, n_out in dims:
        key, kw, km, kg = jax.random.split(key, 4)
        params.append((kaiming_uniform(kw, (n_out, n_in)),
                       kaiming_uniform(km, (n_out, n_in)),
                       kaiming_uniform(kg, (1, n_in))))
    return params


def _nalu_ref(x, w_hat, m_hat, g_vec):
    weights = jnp.tanh(w_hat) * jax.nn.sigmoid(m_hat)
    g = jax.nn.sigmoid(x @ g_vec.T)
    y1 = g * (x @ weights.T)
    y2 = (1.0 - g) * jnp.exp(jnp.log(jnp.abs(x) + EPS) @ weights.T)
    return y1 + y2


def reference_forward(x, params, negative_slope=LEAKY_SLOPE):
    n = len(params)
    h = x
    for li, (w_hat, m_hat, g_vec) in enumerate(params):
        h = _nalu_ref(h, w_hat, m_hat, g_vec)
        if li < n - 1:
            h = jnp.where(h >= 0, h, negative_slope * h)
    return h


if __name__ == "__main__":
    in_features, out_features, num_layers, hidden_dim, batch = 32, 16, 2, 64, 8

    key = jax.random.PRNGKey(0)
    k_x, k_p = jax.random.split(key)
    x = jax.random.normal(k_x, (batch, in_features), jnp.float32)
    params = init_params(k_p, in_features, out_features, num_layers, hidden_dim)

    fwd = jax.jit(n_layer_leaky_nac_forward)
    out = fwd(x, params)
    out = jax.block_until_ready(out)

    ref = reference_forward(x, params)
    assert out.shape == (batch, out_features)
    assert jnp.allclose(out, ref, atol=2e-3, rtol=2e-3), "mismatch vs JAX reference"

    print("KERNEL_OK")
</pallas_src>

<mosaic_0001>
module attributes {stable_mosaic.version = 11 : i64} {
  func.func @_weights_prep_kernel(%arg0: i32, %arg1: memref<64x32xf32, #tpu.memory_space<vmem>>, %arg2: memref<64x32xf32, #tpu.memory_space<vmem>>, %arg3: memref<1x32xf32, #tpu.memory_space<vmem>>, %arg4: memref<64x64xf32, #tpu.memory_space<vmem>>, %arg5: memref<64x64xf32, #tpu.memory_space<vmem>>, %arg6: memref<1x64xf32, #tpu.memory_space<vmem>>, %arg7: memref<16x64xf32, #tpu.memory_space<vmem>>, %arg8: memref<16x64xf32, #tpu.memory_space<vmem>>, %arg9: memref<1x64xf32, #tpu.memory_space<vmem>>, %arg10: memref<128x128xf32, #tpu.memory_space<vmem>>, %arg11: memref<1x128xf32, #tpu.memory_space<vmem>>, %arg12: memref<128x128xf32, #tpu.memory_space<vmem>>, %arg13: memref<1x128xf32, #tpu.memory_space<vmem>>, %arg14: memref<128x128xf32, #tpu.memory_space<vmem>>, %arg15: memref<1x128xf32, #tpu.memory_space<vmem>>, %arg16: memref<128x128xf32, #tpu.memory_space<vmem>>, %arg17: memref<128x128xf32, #tpu.memory_space<vmem>>, %arg18: memref<128x128xf32, #tpu.memory_space<vmem>>) attributes {dimension_semantics = [#tpu.dimension_semantics<arbitrary>], iteration_bounds = array<i64: 1>, scalar_prefetch = 0 : i64, scratch_operands = 3 : i64, tpu.core_type = #tpu.core_type<tc>, window_params = [{pipeline_mode = #tpu.pipeline_mode<synchronous>, transform_indices = @transform_0, window_bounds = array<i64: 64, 32>}, {pipeline_mode = #tpu.pipeline_mode<synchronous>, transform_indices = @transform_1, window_bounds = array<i64: 64, 32>}, {pipeline_mode = #tpu.pipeline_mode<synchronous>, transform_indices = @transform_2, window_bounds = array<i64: 1, 32>}, {pipeline_mode = #tpu.pipeline_mode<synchronous>, transform_indices = @transform_3, window_bounds = array<i64: 64, 64>}, {pipeline_mode = #tpu.pipeline_mode<synchronous>, transform_indices = @transform_4, window_bounds = array<i64: 64, 64>}, {pipeline_mode = #tpu.pipeline_mode<synchronous>, transform_indices = @transform_5, window_bounds = array<i64: 1, 64>}, {pipeline_mode = #tpu.pipeline_mode<synchronous>, transform_indices = @transform_6, window_bounds = array<i64: 16, 64>}, {pipeline_mode = #tpu.pipeline_mode<synchronous>, transform_indices = @transform_7, window_bounds = array<i64: 16, 64>}, {pipeline_mode = #tpu.pipeline_mode<synchronous>, transform_indices = @transform_8, window_bounds = array<i64: 1, 64>}, {pipeline_mode = #tpu.pipeline_mode<synchronous>, transform_indices = @transform_9, window_bounds = array<i64: 128, 128>}, {pipeline_mode = #tpu.pipeline_mode<synchronous>, transform_indices = @transform_10, window_bounds = array<i64: 1, 128>}, {pipeline_mode = #tpu.pipeline_mode<synchronous>, transform_indices = @transform_11, window_bounds = array<i64: 128, 128>}, {pipeline_mode = #tpu.pipeline_mode<synchronous>, transform_indices = @transform_12, window_bounds = array<i64: 1, 128>}, {pipeline_mode = #tpu.pipeline_mode<synchronous>, transform_indices = @transform_13, window_bounds = array<i64: 128, 128>}, {pipeline_mode = #tpu.pipeline_mode<synchronous>, transform_indices = @transform_14, window_bounds = array<i64: 1, 128>}]} {
    %c0 = arith.constant 0 : index
    %c0_0 = arith.constant 0 : index
    %0 = vector.load %arg1[%c0, %c0_0] : memref<64x32xf32, #tpu.memory_space<vmem>>, vector<64x32xf32>
    %1 = math.tanh %0 : vector<64x32xf32>
    %c0_1 = arith.constant 0 : index
    %c0_2 = arith.constant 0 : index
    %2 = vector.load %arg2[%c0_1, %c0_2] : memref<64x32xf32, #tpu.memory_space<vmem>>, vector<64x32xf32>
    %3 = arith.negf %2 : vector<64x32xf32>
    %4 = math.exp %3 : vector<64x32xf32>
    %cst = arith.constant 1.000000e+00 : f32
    %5 = vector.broadcast %cst : f32 to vector<64x32xf32>
    %6 = arith.addf %5, %4 : vector<64x32xf32>
    %7 = arith.divf %5, %6 : vector<64x32xf32>
    %8 = arith.mulf %1, %7 : vector<64x32xf32>
    %cst_3 = arith.constant 0.000000e+00 : f32
    %9 = vector.broadcast %cst_3 : f32 to vector<128x128xf32>
    %c0_4 = arith.constant 0 : index
    %c0_5 = arith.constant 0 : index
    %10 = vector.load %arg16[%c0_4, %c0_5] : memref<128x128xf32, #tpu.memory_space<vmem>>, vector<128x128xf32>
    tpu.vector_store %arg16[%c0_4, %c0_5], %9 {strides = array<i32>} : memref<128x128xf32, #tpu.memory_space<vmem>>, vector<128x128xf32>,
    %c0_6 = arith.constant 0 : index
    %c0_7 = arith.constant 0 : index
    %11 = vector.load %arg16[%c0_6, %c0_7] : memref<128x128xf32, #tpu.memory_space<vmem>>, vector<64x32xf32>
    tpu.vector_store %arg16[%c0_6, %c0_7], %8 {strides = array<i32>} : memref<128x128xf32, #tpu.memory_space<vmem>>, vector<64x32xf32>,
    %c0_8 = arith.constant 0 : index
    %c0_9 = arith.constant 0 : index
    %12 = vector.load %arg16[%c0_8, %c0_9] : memref<128x128xf32, #tpu.memory_space<vmem>>, vector<128x128xf32>
    %13 = tpu.transpose %12, [1, 0] : vector<128x128xf32> -> vector<128x128xf32>
    %c0_10 = arith.constant 0 : index
    %c0_11 = arith.constant 0 : index
    %14 = vector.load %arg10[%c0_10, %c0_11] : memref<128x128xf32, #tpu.memory_space<vmem>>, vector<128x128xf32>
    tpu.vector_store %arg10[%c0_10, %c0_11], %13 {strides = array<i32>} : memref<128x128xf32, #tpu.memory_space<vmem>>, vector<128x128xf32>,
    %cst_12 = arith.constant 0.000000e+00 : f32
    %15 = vector.broadcast %cst_12 : f32 to vector<1x128xf32>
    %c0_13 = arith.constant 0 : index
    %c0_14 = arith.constant 0 : index
    %16 = vector.load %arg11[%c0_13, %c0_14] : memref<1x128xf32, #tpu.memory_space<vmem>>, vector<1x128xf32>
    tpu.vector_store %arg11[%c0_13, %c0_14], %15 {strides = array<i32>} : memref<1x128xf32, #tpu.memory_space<vmem>>, vector<1x128xf32>,
    %c0_15 = arith.constant 0 : index
    %c0_16 = arith.constant 0 : index
    %17 = vector.load %arg3[%c0_15, %c0_16] : memref<1x32xf32, #tpu.memory_space<vmem>>, vector<1x32xf32>
    %c0_17 = arith.constant 0 : index
    %c0_18 = arith.constant 0 : index
    %18 = vector.load %arg11[%c0_17, %c0_18] : memref<1x128xf32, #tpu.memory_space<vmem>>, vector<1x32xf32>
    tpu.vector_store %arg11[%c0_17, %c0_18], %17 {strides = array<i32>} : memref<1x128xf32, #tpu.memory_space<vmem>>, vector<1x32xf32>,
    %c0_19 = arith.constant 0 : index
    %c0_20 = arith.constant 0 : index
    %19 = vector.load %arg4[%c0_19, %c0_20] : memref<64x64xf32, #tpu.memory_space<vmem>>, vector<64x64xf32>
    %20 = math.tanh %19 : vector<64x64xf32>
    %c0_21 = arith.constant 0 : index
    %c0_22 = arith.constant 0 : index
    %21 = vector.load %arg5[%c0_21, %c0_22] : memref<64x64xf32, #tpu.memory_space<vmem>>, vector<64x64xf32>
    %22 = arith.negf %21 : vector<64x64xf32>
    %23 = math.exp %22 : vector<64x64xf32>
    %cst_23 = arith.constant 1.000000e+00 : f32
    %24 = vector.broadcast %cst_23 : f32 to vector<64x64xf32>
    %25 = arith.addf %24, %23 : vector<64x64xf32>
    %26 = arith.divf %24, %25 : vector<64x64xf32>
    %27 = arith.mulf %20, %26 : vector<64x64xf32>
    %cst_24 = arith.constant 0.000000e+00 : f32
    %28 = vector.broadcast %cst_24 : f32 to vector<128x128xf32>
    %c0_25 = arith.constant 0 : index
    %c0_26 = arith.constant 0 : index
    %29 = vector.load %arg17[%c0_25, %c0_26] : memref<128x128xf32, #tpu.memory_space<vmem>>, vector<128x128xf32>
    tpu.vector_store %arg17[%c0_25, %c0_26], %28 {strides = array<i32>} : memref<128x128xf32, #tpu.memory_space<vmem>>, vector<128x128xf32>,
    %c0_27 = arith.constant 0 : index
    %c0_28 = arith.constant 0 : index
    %30 = vector.load %arg17[%c0_27, %c0_28] : memref<128x128xf32, #tpu.memory_space<vmem>>, vector<64x64xf32>
    tpu.vector_store %arg17[%c0_27, %c0_28], %27 {strides = array<i32>} : memref<128x128xf32, #tpu.memory_space<vmem>>, vector<64x64xf32>,
    %c0_29 = arith.constant 0 : index
    %c0_30 = arith.constant 0 : index
    %31 = vector.load %arg17[%c0_29, %c0_30] : memref<128x128xf32, #tpu.memory_space<vmem>>, vector<128x128xf32>
    %32 = tpu.transpose %31, [1, 0] : vector<128x128xf32> -> vector<128x128xf32>
    %c0_31 = arith.constant 0 : index
    %c0_32 = arith.constant 0 : index
    %33 = vector.load %arg12[%c0_31, %c0_32] : memref<128x128xf32, #tpu.memory_space<vmem>>, vector<128x128xf32>
    tpu.vector_store %arg12[%c0_31, %c0_32], %32 {strides = array<i32>} : memref<128x128xf32, #tpu.memory_space<vmem>>, vector<128x128xf32>,
    %cst_33 = arith.constant 0.000000e+00 : f32
    %34 = vector.broadcast %cst_33 : f32 to vector<1x128xf32>
    %c0_34 = arith.constant 0 : index
    %c0_35 = arith.constant 0 : index
    %35 = vector.load %arg13[%c0_34, %c0_35] : memref<1x128xf32, #tpu.memory_space<vmem>>, vector<1x128xf32>
    tpu.vector_store %arg13[%c0_34, %c0_35], %34 {strides = array<i32>} : memref<1x128xf32, #tpu.memory_space<vmem>>, vector<1x128xf32>,
    %c0_36 = arith.constant 0 : index
    %c0_37 = arith.constant 0 : index
    %36 = vector.load %arg6[%c0_36, %c0_37] : memref<1x64xf32, #tpu.memory_space<vmem>>, vector<1x64xf32>
    %c0_38 = arith.constant 0 : index
    %c0_39 = arith.constant 0 : index
    %37 = vector.load %arg13[%c0_38, %c0_39] : memref<1x128xf32, #tpu.memory_space<vmem>>, vector<1x64xf32>
    tpu.vector_store %arg13[%c0_38, %c0_39], %36 {strides = array<i32>} : memref<1x128xf32, #tpu.memory_space<vmem>>, vector<1x64xf32>,
    %c0_40 = arith.constant 0 : index
    %c0_41 = arith.constant 0 : index
    %38 = vector.load %arg7[%c0_40, %c0_41] : memref<16x64xf32, #tpu.memory_space<vmem>>, vector<16x64xf32>
    %39 = math.tanh %38 : vector<16x64xf32>
    %c0_42 = arith.constant 0 : index
    %c0_43 = arith.constant 0 : index
    %40 = vector.load %arg8[%c0_42, %c0_43] : memref<16x64xf32, #tpu.memory_space<vmem>>, vector<16x64xf32>
    %41 = arith.negf %40 : vector<16x64xf32>
    %42 = math.exp %41 : vector<16x64xf32>
    %cst_44 = arith.constant 1.000000e+00 : f32
    %43 = vector.broadcast %cst_44 : f32 to vector<16x64xf32>
    %44 = arith.addf %43, %42 : vector<16x64xf32>
    %45 = arith.divf %43, %44 : vector<16x64xf32>
    %46 = arith.mulf %39, %45 : vector<16x64xf32>
    %cst_45 = arith.constant 0.000000e+00 : f32
    %47 = vector.broadcast %cst_45 : f32 to vector<128x128xf32>
    %c0_46 = arith.constant 0 : index
    %c0_47 = arith.constant 0 : index
    %48 = vector.load %arg18[%c0_46, %c0_47] : memref<128x128xf32, #tpu.memory_space<vmem>>, vector<128x128xf32>
    tpu.vector_store %arg18[%c0_46, %c0_47], %47 {strides = array<i32>} : memref<128x128xf32, #tpu.memory_space<vmem>>, vector<128x128xf32>,
    %c0_48 = arith.constant 0 : index
    %c0_49 = arith.constant 0 : index
    %49 = vector.load %arg18[%c0_48, %c0_49] : memref<128x128xf32, #tpu.memory_space<vmem>>, vector<16x64xf32>
    tpu.vector_store %arg18[%c0_48, %c0_49], %46 {strides = array<i32>} : memref<128x128xf32, #tpu.memory_space<vmem>>, vector<16x64xf32>,
    %c0_50 = arith.constant 0 : index
    %c0_51 = arith.constant 0 : index
    %50 = vector.load %arg18[%c0_50, %c0_51] : memref<128x128xf32, #tpu.memory_space<vmem>>, vector<128x128xf32>
    %51 = tpu.transpose %50, [1, 0] : vector<128x128xf32> -> vector<128x128xf32>
    %c0_52 = arith.constant 0 : index
    %c0_53 = arith.constant 0 : index
    %52 = vector.load %arg14[%c0_52, %c0_53] : memref<128x128xf32, #tpu.memory_space<vmem>>, vector<128x128xf32>
    tpu.vector_store %arg14[%c0_52, %c0_53], %51 {strides = array<i32>} : memref<128x128xf32, #tpu.memory_space<vmem>>, vector<128x128xf32>,
    %cst_54 = arith.constant 0.000000e+00 : f32
    %53 = vector.broadcast %cst_54 : f32 to vector<1x128xf32>
    %c0_55 = arith.constant 0 : index
    %c0_56 = arith.constant 0 : index
    %54 = vector.load %arg15[%c0_55, %c0_56] : memref<1x128xf32, #tpu.memory_space<vmem>>, vector<1x128xf32>
    tpu.vector_store %arg15[%c0_55, %c0_56], %53 {strides = array<i32>} : memref<1x128xf32, #tpu.memory_space<vmem>>, vector<1x128xf32>,
    %c0_57 = arith.constant 0 : index
    %c0_58 = arith.constant 0 : index
    %55 = vector.load %arg9[%c0_57, %c0_58] : memref<1x64xf32, #tpu.memory_space<vmem>>, vector<1x64xf32>
    %c0_59 = arith.constant 0 : index
    %c0_60 = arith.constant 0 : index
    %56 = vector.load %arg15[%c0_59, %c0_60] : memref<1x128xf32, #tpu.memory_space<vmem>>, vector<1x64xf32>
    tpu.vector_store %arg15[%c0_59, %c0_60], %55 {strides = array<i32>} : memref<1x128xf32, #tpu.memory_space<vmem>>, vector<1x64xf32>,
    return
  }
  func.func @transform_0(%arg0: i32) -> (i32, i32) {
    %c0_i32 = arith.constant 0 : i32
    %c0_i32_0 = arith.constant 0 : i32
    %c0_i32_1 = arith.constant 0 : i32
    return %c0_i32, %c0_i32_0 : i32, i32
  }
  func.func @transform_1(%arg0: i32) -> (i32, i32) {
    %c0_i32 = arith.constant 0 : i32
    %c0_i32_0 = arith.constant 0 : i32
    %c0_i32_1 = arith.constant 0 : i32
    return %c0_i32, %c0_i32_0 : i32, i32
  }
  func.func @transform_2(%arg0: i32) -> (i32, i32) {
    %c0_i32 = arith.constant 0 : i32
    %c0_i32_0 = arith.constant 0 : i32
    %c0_i32_1 = arith.constant 0 : i32
    return %c0_i32, %c0_i32_0 : i32, i32
  }
  func.func @transform_3(%arg0: i32) -> (i32, i32) {
    %c0_i32 = arith.constant 0 : i32
    %c0_i32_0 = arith.constant 0 : i32
    %c0_i32_1 = arith.constant 0 : i32
    return %c0_i32, %c0_i32_0 : i32, i32
  }
  func.func @transform_4(%arg0: i32) -> (i32, i32) {
    %c0_i32 = arith.constant 0 : i32
    %c0_i32_0 = arith.constant 0 : i32
    %c0_i32_1 = arith.constant 0 : i32
    return %c0_i32, %c0_i32_0 : i32, i32
  }
  func.func @transform_5(%arg0: i32) -> (i32, i32) {
    %c0_i32 = arith.constant 0 : i32
    %c0_i32_0 = arith.constant 0 : i32
    %c0_i32_1 = arith.constant 0 : i32
    return %c0_i32, %c0_i32_0 : i32, i32
  }
  func.func @transform_6(%arg0: i32) -> (i32, i32) {
    %c0_i32 = arith.constant 0 : i32
    %c0_i32_0 = arith.constant 0 : i32
    %c0_i32_1 = arith.constant 0 : i32
    return %c0_i32, %c0_i32_0 : i32, i32
  }
  func.func @transform_7(%arg0: i32) -> (i32, i32) {
    %c0_i32 = arith.constant 0 : i32
    %c0_i32_0 = arith.constant 0 : i32
    %c0_i32_1 = arith.constant 0 : i32
    return %c0_i32, %c0_i32_0 : i32, i32
  }
  func.func @transform_8(%arg0: i32) -> (i32, i32) {
    %c0_i32 = arith.constant 0 : i32
    %c0_i32_0 = arith.constant 0 : i32
    %c0_i32_1 = arith.constant 0 : i32
    return %c0_i32, %c0_i32_0 : i32, i32
  }
  func.func @transform_9(%arg0: i32) -> (i32, i32) {
    %c0_i32 = arith.constant 0 : i32
    %c0_i32_0 = arith.constant 0 : i32
    %c0_i32_1 = arith.constant 0 : i32
    return %c0_i32, %c0_i32_0 : i32, i32
  }
  func.func @transform_10(%arg0: i32) -> (i32, i32) {
    %c0_i32 = arith.constant 0 : i32
    %c0_i32_0 = arith.constant 0 : i32
    %c0_i32_1 = arith.constant 0 : i32
    return %c0_i32, %c0_i32_0 : i32, i32
  }
  func.func @transform_11(%arg0: i32) -> (i32, i32) {
    %c0_i32 = arith.constant 0 : i32
    %c0_i32_0 = arith.constant 0 : i32
    %c0_i32_1 = arith.constant 0 : i32
    return %c0_i32, %c0_i32_0 : i32, i32
  }
  func.func @transform_12(%arg0: i32) -> (i32, i32) {
    %c0_i32 = arith.constant 0 : i32
    %c0_i32_0 = arith.constant 0 : i32
    %c0_i32_1 = arith.constant 0 : i32
    return %c0_i32, %c0_i32_0 : i32, i32
  }
  func.func @transform_13(%arg0: i32) -> (i32, i32) {
    %c0_i32 = arith.constant 0 : i32
    %c0_i32_0 = arith.constant 0 : i32
    %c0_i32_1 = arith.constant 0 : i32
    return %c0_i32, %c0_i32_0 : i32, i32
  }
  func.func @transform_14(%arg0: i32) -> (i32, i32) {
    %c0_i32 = arith.constant 0 : i32
    %c0_i32_0 = arith.constant 0 : i32
    %c0_i32_1 = arith.constant 0 : i32
    return %c0_i32, %c0_i32_0 : i32, i32
  }
}

module attributes {stable_mosaic.version = 11 : i64} {
  func.func @_nalu_stack_kernel(%arg0: i32, %arg1: memref<8x128xf32, #tpu.memory_space<vmem>>, %arg2: memref<128x128xf32, #tpu.memory_space<vmem>>, %arg3: memref<1x128xf32, #tpu.memory_space<vmem>>, %arg4: memref<128x128xf32, #tpu.memory_space<vmem>>, %arg5: memref<1x128xf32, #tpu.memory_space<vmem>>, %arg6: memref<128x128xf32, #tpu.memory_space<vmem>>, %arg7: memref<1x128xf32, #tpu.memory_space<vmem>>, %arg8: memref<8x128xf32, #tpu.memory_space<vmem>>) attributes {dimension_semantics = [#tpu.dimension_semantics<parallel>], iteration_bounds = array<i64: 1>, scalar_prefetch = 0 : i64, scratch_operands = 0 : i64, tpu.core_type = #tpu.core_type<tc>, window_params = [{transform_indices = @transform_0, window_bounds = array<i64: 8, 128>}, {pipeline_mode = #tpu.pipeline_mode<synchronous>, transform_indices = @transform_1, window_bounds = array<i64: 128, 128>}, {pipeline_mode = #tpu.pipeline_mode<synchronous>, transform_indices = @transform_2, window_bounds = array<i64: 1, 128>}, {pipeline_mode = #tpu.pipeline_mode<synchronous>, transform_indices = @transform_3, window_bounds = array<i64: 128, 128>}, {pipeline_mode = #tpu.pipeline_mode<synchronous>, transform_indices = @transform_4, window_bounds = array<i64: 1, 128>}, {pipeline_mode = #tpu.pipeline_mode<synchronous>, transform_indices = @transform_5, window_bounds = array<i64: 128, 128>}, {pipeline_mode = #tpu.pipeline_mode<synchronous>, transform_indices = @transform_6, window_bounds = array<i64: 1, 128>}, {transform_indices = @transform_7, window_bounds = array<i64: 8, 128>}]} {
    %c8_i32 = arith.constant 8 : i32
    %0 = arith.muli %arg0, %c8_i32 : i32
    %1 = tpu.iota {dimensions = array<i32: 0>} : vector<8x1xi32>
    %2 = vector.broadcast %0 : i32 to vector<8x1xi32>
    %3 = arith.addi %2, %1 : vector<8x1xi32>
    %c8_i32_0 = arith.constant 8 : i32
    %4 = vector.broadcast %c8_i32_0 : i32 to vector<8x1xi32>
    %5 = arith.cmpi slt, %3, %4 : vector<8x1xi32>
    %c0 = arith.constant 0 : index
    %c0_1 = arith.constant 0 : index
    %6 = vector.load %arg1[%c0, %c0_1] : memref<8x128xf32, #tpu.memory_space<vmem>>, vector<8x128xf32>
    %c0_2 = arith.constant 0 : index
    %c0_3 = arith.constant 0 : index
    %7 = vector.load %arg2[%c0_2, %c0_3] : memref<128x128xf32, #tpu.memory_space<vmem>>, vector<128x128xf32>
    %c0_4 = arith.constant 0 : index
    %c0_5 = arith.constant 0 : index
    %8 = vector.load %arg3[%c0_4, %c0_5] : memref<1x128xf32, #tpu.memory_space<vmem>>, vector<1x128xf32>
    %9 = math.absf %6 : vector<8x128xf32>
    %cst = arith.constant 9.99999997E-7 : f32
    %10 = vector.broadcast %cst : f32 to vector<8x128xf32>
    %11 = arith.addf %9, %10 : vector<8x128xf32>
    %12 = math.log %11 : vector<8x128xf32>
    %cst_6 = arith.constant dense<0.000000e+00> : vector<8x128xf32>
    %13 = tpu.matmul %6, %7, %cst_6 {dimension_numbers = #tpu.dot_dimension_numbers<[1], [0], [0], [1], [0, 0, 1, 1], [], []>} : vector<8x128xf32>, vector<128x128xf32>, vector<8x128xf32> -> vector<8x128xf32>
    %cst_7 = arith.constant dense<0.000000e+00> : vector<8x128xf32>
    %14 = tpu.matmul %12, %7, %cst_7 {dimension_numbers = #tpu.dot_dimension_numbers<[1], [0], [0], [1], [0, 0, 1, 1], [], []>} : vector<8x128xf32>, vector<128x128xf32>, vector<8x128xf32> -> vector<8x128xf32>
    %15 = math.exp %14 : vector<8x128xf32>
    %16 = vector.broadcast %8 : vector<1x128xf32> to vector<8x128xf32>
    %17 = arith.mulf %6, %16 : vector<8x128xf32>
    %cst_8 = arith.constant dense<0.000000e+00> : vector<8xf32>
    %18 = vector.multi_reduction <add>, %17, %cst_8 [1] : vector<8x128xf32> to vector<8xf32>
    %19 = vector.shape_cast %18 : vector<8xf32> to vector<8x1xf32>
    %20 = arith.negf %19 : vector<8x1xf32>
    %21 = math.exp %20 : vector<8x1xf32>
    %cst_9 = arith.constant 1.000000e+00 : f32
    %22 = vector.broadcast %cst_9 : f32 to vector<8x1xf32>
    %23 = arith.addf %22, %21 : vector<8x1xf32>
    %24 = arith.divf %22, %23 : vector<8x1xf32>
    %25 = arith.subf %13, %15 : vector<8x128xf32>
    %26 = vector.broadcast %24 : vector<8x1xf32> to vector<8x128xf32>
    %27 = arith.mulf %26, %25 : vector<8x128xf32>
    %28 = arith.addf %15, %27 : vector<8x128xf32>
    %cst_10 = arith.constant 0.000000e+00 : f32
    %29 = vector.broadcast %cst_10 : f32 to vector<8x128xf32>
    %30 = arith.cmpf oge, %28, %29 : vector<8x128xf32>
    %cst_11 = arith.constant 2.000000e-01 : f32
    %31 = vector.broadcast %cst_11 : f32 to vector<8x128xf32>
    %32 = arith.mulf %31, %28 : vector<8x128xf32>
    %33 = arith.select %30, %28, %32 : vector<8x128xi1>, vector<8x128xf32>
    %cst_12 = arith.constant 0.000000e+00 : f32
    %34 = vector.shape_cast %5 : vector<8x1xi1> to vector<8x1xi1>
    %35 = vector.broadcast %34 : vector<8x1xi1> to vector<8x128xi1>
    %36 = vector.broadcast %cst_12 : f32 to vector<8x128xf32>
    %37 = arith.select %35, %33, %36 : vector<8x128xi1>, vector<8x128xf32>
    %c0_13 = arith.constant 0 : index
    %c0_14 = arith.constant 0 : index
    %38 = vector.load %arg4[%c0_13, %c0_14] : memref<128x128xf32, #tpu.memory_space<vmem>>, vector<128x128xf32>
    %c0_15 = arith.constant 0 : index
    %c0_16 = arith.constant 0 : index
    %39 = vector.load %arg5[%c0_15, %c0_16] : memref<1x128xf32, #tpu.memory_space<vmem>>, vector<1x128xf32>
    %40 = math.absf %37 : vector<8x128xf32>
    %cst_17 = arith.constant 9.99999997E-7 : f32
    %41 = vector.broadcast %cst_17 : f32 to vector<8x128xf32>
    %42 = arith.addf %40, %41 : vector<8x128xf32>
    %43 = math.log %42 : vector<8x128xf32>
    %cst_18 = arith.constant dense<0.000000e+00> : vector<8x128xf32>
    %44 = tpu.matmul %37, %38, %cst_18 {dimension_numbers = #tpu.dot_dimension_numbers<[1], [0], [0], [1], [0, 0, 1, 1], [], []>} : vector<8x128xf32>, vector<128x128xf32>, vector<8x128xf32> -> vector<8x128xf32>
    %cst_19 = arith.constant dense<0.000000e+00> : vector<8x128xf32>
    %45 = tpu.matmul %43, %38, %cst_19 {dimension_numbers = #tpu.dot_dimension_numbers<[1], [0], [0], [1], [0, 0, 1, 1], [], []>} : vector<8x128xf32>, vector<128x128xf32>, vector<8x128xf32> -> vector<8x128xf32>
    %46 = math.exp %45 : vector<8x128xf32>
    %47 = vector.broadcast %39 : vector<1x128xf32> to vector<8x128xf32>
    %48 = arith.mulf %37, %47 : vector<8x128xf32>
    %cst_20 = arith.constant dense<0.000000e+00> : vector<8xf32>
    %49 = vector.multi_reduction <add>, %48, %cst_20 [1] : vector<8x128xf32> to vector<8xf32>
    %50 = vector.shape_cast %49 : vector<8xf32> to vector<8x1xf32>
    %51 = arith.negf %50 : vector<8x1xf32>
    %52 = math.exp %51 : vector<8x1xf32>
    %cst_21 = arith.constant 1.000000e+00 : f32
    %53 = vector.broadcast %cst_21 : f32 to vector<8x1xf32>
    %54 = arith.addf %53, %52 : vector<8x1xf32>
    %55 = arith.divf %53, %54 : vector<8x1xf32>
    %56 = arith.subf %44, %46 : vector<8x128xf32>
    %57 = vector.broadcast %55 : vector<8x1xf32> to vector<8x128xf32>
    %58 = arith.mulf %57, %56 : vector<8x128xf32>
    %59 = arith.addf %46, %58 : vector<8x128xf32>
    %cst_22 = arith.constant 0.000000e+00 : f32
    %60 = vector.broadcast %cst_22 : f32 to vector<8x128xf32>
    %61 = arith.cmpf oge, %59, %60 : vector<8x128xf32>
    %cst_23 = arith.constant 2.000000e-01 : f32
    %62 = vector.broadcast %cst_23 : f32 to vector<8x128xf32>
    %63 = arith.mulf %62, %59 : vector<8x128xf32>
    %64 = arith.select %61, %59, %63 : vector<8x128xi1>, vector<8x128xf32>
    %cst_24 = arith.constant 0.000000e+00 : f32
    %65 = vector.shape_cast %5 : vector<8x1xi1> to vector<8x1xi1>
    %66 = vector.broadcast %65 : vector<8x1xi1> to vector<8x128xi1>
    %67 = vector.broadcast %cst_24 : f32 to vector<8x128xf32>
    %68 = arith.select %66, %64, %67 : vector<8x128xi1>, vector<8x128xf32>
    %c0_25 = arith.constant 0 : index
    %c0_26 = arith.constant 0 : index
    %69 = vector.load %arg6[%c0_25, %c0_26] : memref<128x128xf32, #tpu.memory_space<vmem>>, vector<128x128xf32>
    %c0_27 = arith.constant 0 : index
    %c0_28 = arith.constant 0 : index
    %70 = vector.load %arg7[%c0_27, %c0_28] : memref<1x128xf32, #tpu.memory_space<vmem>>, vector<1x128xf32>
    %71 = math.absf %68 : vector<8x128xf32>
    %cst_29 = arith.constant 9.99999997E-7 : f32
    %72 = vector.broadcast %cst_29 : f32 to vector<8x128xf32>
    %73 = arith.addf %71, %72 : vector<8x128xf32>
    %74 = math.log %73 : vector<8x128xf32>
    %cst_30 = arith.constant dense<0.000000e+00> : vector<8x128xf32>
    %75 = tpu.matmul %68, %69, %cst_30 {dimension_numbers = #tpu.dot_dimension_numbers<[1], [0], [0], [1], [0, 0, 1, 1], [], []>} : vector<8x128xf32>, vector<128x128xf32>, vector<8x128xf32> -> vector<8x128xf32>
    %cst_31 = arith.constant dense<0.000000e+00> : vector<8x128xf32>
    %76 = tpu.matmul %74, %69, %cst_31 {dimension_numbers = #tpu.dot_dimension_numbers<[1], [0], [0], [1], [0, 0, 1, 1], [], []>} : vector<8x128xf32>, vector<128x128xf32>, vector<8x128xf32> -> vector<8x128xf32>
    %77 = math.exp %76 : vector<8x128xf32>
    %78 = vector.broadcast %70 : vector<1x128xf32> to vector<8x128xf32>
    %79 = arith.mulf %68, %78 : vector<8x128xf32>
    %cst_32 = arith.constant dense<0.000000e+00> : vector<8xf32>
    %80 = vector.multi_reduction <add>, %79, %cst_32 [1] : vector<8x128xf32> to vector<8xf32>
    %81 = vector.shape_cast %80 : vector<8xf32> to vector<8x1xf32>
    %82 = arith.negf %81 : vector<8x1xf32>
    %83 = math.exp %82 : vector<8x1xf32>
    %cst_33 = arith.constant 1.000000e+00 : f32
    %84 = vector.broadcast %cst_33 : f32 to vector<8x1xf32>
    %85 = arith.addf %84, %83 : vector<8x1xf32>
    %86 = arith.divf %84, %85 : vector<8x1xf32>
    %87 = arith.subf %75, %77 : vector<8x128xf32>
    %88 = vector.broadcast %86 : vector<8x1xf32> to vector<8x128xf32>
    %89 = arith.mulf %88, %87 : vector<8x128xf32>
    %90 = arith.addf %77, %89 : vector<8x128xf32>
    %cst_34 = arith.constant 0.000000e+00 : f32
    %91 = vector.shape_cast %5 : vector<8x1xi1> to vector<8x1xi1>
    %92 = vector.broadcast %91 : vector<8x1xi1> to vector<8x128xi1>
    %93 = vector.broadcast %cst_34 : f32 to vector<8x128xf32>
    %94 = arith.select %92, %90, %93 : vector<8x128xi1>, vector<8x128xf32>
    %c0_35 = arith.constant 0 : index
    %c0_36 = arith.constant 0 : index
    %95 = vector.load %arg8[%c0_35, %c0_36] : memref<8x128xf32, #tpu.memory_space<vmem>>, vector<8x128xf32>
    tpu.vector_store %arg8[%c0_35, %c0_36], %94 {strides = array<i32>} : memref<8x128xf32, #tpu.memory_space<vmem>>, vector<8x128xf32>,
    return
  }
  func.func @transform_0(%arg0: i32) -> (i32, i32) {
    %c0_i32 = arith.constant 0 : i32
    %c0_i32_0 = arith.constant 0 : i32
    return %arg0, %c0_i32 : i32, i32
  }
  func.func @transform_1(%arg0: i32) -> (i32, i32) {
    %c0_i32 = arith.constant 0 : i32
    %c0_i32_0 = arith.constant 0 : i32
    %c0_i32_1 = arith.constant 0 : i32
    return %c0_i32, %c0_i32_0 : i32, i32
  }
  func.func @transform_2(%arg0: i32) -> (i32, i32) {
    %c0_i32 = arith.constant 0 : i32
    %c0_i32_0 = arith.constant 0 : i32
    %c0_i32_1 = arith.constant 0 : i32
    return %c0_i32, %c0_i32_0 : i32, i32
  }
  func.func @transform_3(%arg0: i32) -> (i32, i32) {
    %c0_i32 = arith.constant 0 : i32
    %c0_i32_0 = arith.constant 0 : i32
    %c0_i32_1 = arith.constant 0 : i32
    return %c0_i32, %c0_i32_0 : i32, i32
  }
  func.func @transform_4(%arg0: i32) -> (i32, i32) {
    %c0_i32 = arith.constant 0 : i32
    %c0_i32_0 = arith.constant 0 : i32
    %c0_i32_1 = arith.constant 0 : i32
    return %c0_i32, %c0_i32_0 : i32, i32
  }
  func.func @transform_5(%arg0: i32) -> (i32, i32) {
    %c0_i32 = arith.constant 0 : i32
    %c0_i32_0 = arith.constant 0 : i32
    %c0_i32_1 = arith.constant 0 : i32
    return %c0_i32, %c0_i32_0 : i32, i32
  }
  func.func @transform_6(%arg0: i32) -> (i32, i32) {
    %c0_i32 = arith.constant 0 : i32
    %c0_i32_0 = arith.constant 0 : i32
    %c0_i32_1 = arith.constant 0 : i32
    return %c0_i32, %c0_i32_0 : i32, i32
  }
  func.func @transform_7(%arg0: i32) -> (i32, i32) {
    %c0_i32 = arith.constant 0 : i32
    %c0_i32_0 = arith.constant 0 : i32
    return %arg0, %c0_i32 : i32, i32
  }
}

</mosaic_0001>

<llo_original>
// kernel: n_layer_leaky_nac_forward.2
$region0: #{n_layer_leaky_nac_forward.2}
  #allocation0 [shape = 'u32[]', space=smem, size = 0x4, offset = 0x4, fixed_abs, tag = 'smem constant byte address 0x4 - core index']
  #allocation1 [shape = 'u32[144,128]{1,0:T(1,128)}', space=vmem, size = 0x12000, scoped, tag = 'internal scratch']
  #allocation2 [shape = 'f32[128,128]{1,0:T(8,128)}', space=vmem, size = 0x10000, scoped, tag = 'scratch operand']
  #allocation3 [shape = 'f32[128,128]{1,0:T(8,128)}', space=vmem, size = 0x10000, scoped, tag = 'scratch operand']
  #allocation4 [shape = 'f32[128,128]{1,0:T(8,128)}', space=vmem, size = 0x10000, scoped, tag = 'scratch operand']
  %s0 = inlined_call_operand.vmem [shape: f32[64,32], index: 0, kind: input, shape index: {}]
  %s1 = inlined_call_operand.vmem [shape: f32[64,32], index: 1, kind: input, shape index: {}]
  %s2 = inlined_call_operand.vmem [shape: f32[1,32], index: 2, kind: input, shape index: {}]
  %s3 = inlined_call_operand.vmem [shape: f32[64,64], index: 3, kind: input, shape index: {}]
  %s4 = inlined_call_operand.vmem [shape: f32[64,64], index: 4, kind: input, shape index: {}]
  %s5 = inlined_call_operand.vmem [shape: f32[1,64], index: 5, kind: input, shape index: {}]
  %s6 = inlined_call_operand.vmem [shape: f32[16,64], index: 6, kind: input, shape index: {}]
  %s7 = inlined_call_operand.vmem [shape: f32[16,64], index: 7, kind: input, shape index: {}]
  %s8 = inlined_call_operand.hbm [shape: f32[1,64], index: 8, kind: input, shape index: {}]
  %s9 = inlined_call_operand.vmem [shape: f32[128,128], index: 9, kind: output, shape index: {0}]
  %s10 = inlined_call_operand.vmem [shape: f32[1,128], index: 10, kind: output, shape index: {1}]
  %s11 = inlined_call_operand.vmem [shape: f32[128,128], index: 11, kind: output, shape index: {2}]
  %s12 = inlined_call_operand.vmem [shape: f32[1,128], index: 12, kind: output, shape index: {3}]
  %s13 = inlined_call_operand.vmem [shape: f32[128,128], index: 13, kind: output, shape index: {4}]
  %s14 = inlined_call_operand.vmem [shape: f32[1,128], index: 14, kind: output, shape index: {5}]
  %15 = xla_tuple %s9, %s10, %s11, %s12, %s13, %s14
  %s16 = sld [smem:[#allocation0]]
  $region90: #{n_layer_leaky_nac_forward.2} parent=0
    _
  %s18 = ssub.s32 1, %s16
  %s19 = scalar_select 0, %s18, %s16
  $region1: #{n_layer_leaky_nac_forward.2} parent=0
    #allocation5 [shape = 'u8[512]{0}', space=vmem, size = 0x400, scoped, tag = 'input window, operand 8, single buffered']
    #allocation6 [shape = 's32[1]{0}', space=sflag, size = 0x4, scoped, tag = 'scoped memory for n_layer_leaky_nac_forward.2']
    %20 = vsyncpa [#allocation6], 0
    // Predicated region
    $region2: #{n_layer_leaky_nac_forward.2} parent=1 // pred_check
      _
    $region3: #{n_layer_leaky_nac_forward.2} parent=1 // pred_check_branch
      %22 = sbr.rel (0) target = $region5
    $region4: #{n_layer_leaky_nac_forward.2} parent=1 // pred_region
      _
    $region5: #{n_layer_leaky_nac_forward.2} parent=1 // pred_fallthru
      _
    // Predicated region
    $region6: #{n_layer_leaky_nac_forward.2} parent=1 // pred_check
      _
    $region7: #{n_layer_leaky_nac_forward.2} parent=1 // pred_check_branch
      %24 = sbr.rel (0) target = $region9
    $region8: #{n_layer_leaky_nac_forward.2} parent=1 // pred_region
      _
    $region9: #{n_layer_leaky_nac_forward.2} parent=1 // pred_fallthru
      _
    // Predicated region
    $region10: #{n_layer_leaky_nac_forward.2} parent=1 // pred_check
      _
    $region11: #{n_layer_leaky_nac_forward.2} parent=1 // pred_check_branch
      %26 = sbr.rel (0) target = $region13
    $region12: #{n_layer_leaky_nac_forward.2} parent=1 // pred_region
      _
    $region13: #{n_layer_leaky_nac_forward.2} parent=1 // pred_fallthru
      _
    // Predicated region
    $region14: #{n_layer_leaky_nac_forward.2} parent=1 // pred_check
      _
    $region15: #{n_layer_leaky_nac_forward.2} parent=1 // pred_check_branch
      %28 = sbr.rel (0) target = $region17
    $region16: #{n_layer_leaky_nac_forward.2} parent=1 // pred_region
      _
    $region17: #{n_layer_leaky_nac_forward.2} parent=1 // pred_fallthru
      _
    // Predicated region
    $region18: #{n_layer_leaky_nac_forward.2} parent=1 // pred_check
      _
    $region19: #{n_layer_leaky_nac_forward.2} parent=1 // pred_check_branch
      %30 = sbr.rel (0) target = $region21
    $region20: #{n_layer_leaky_nac_forward.2} parent=1 // pred_region
      _
    $region21: #{n_layer_leaky_nac_forward.2} parent=1 // pred_fallthru
      _
    // Predicated region
    $region22: #{n_layer_leaky_nac_forward.2} parent=1 // pred_check
      _
    $region23: #{n_layer_leaky_nac_forward.2} parent=1 // pred_check_branch
      %32 = sbr.rel (0) target = $region25
    $region24: #{n_layer_leaky_nac_forward.2} parent=1 // pred_region
      _
    $region25: #{n_layer_leaky_nac_forward.2} parent=1 // pred_fallthru
      _
    // Predicated region
    $region26: #{n_layer_leaky_nac_forward.2} parent=1 // pred_check
      _
    $region27: #{n_layer_leaky_nac_forward.2} parent=1 // pred_check_branch
      %34 = sbr.rel (0) target = $region29
    $region28: #{n_layer_leaky_nac_forward.2} parent=1 // pred_region
      _
    $region29: #{n_layer_leaky_nac_forward.2} parent=1 // pred_fallthru
      _
    // Predicated region
    $region30: #{n_layer_leaky_nac_forward.2} parent=1 // pred_check
      _
    $region31: #{n_layer_leaky_nac_forward.2} parent=1 // pred_check_branch
      %36 = sbr.rel (0) target = $region33
    $region32: #{n_layer_leaky_nac_forward.2} parent=1 // pred_region
      _
    $region33: #{n_layer_leaky_nac_forward.2} parent=1 // pred_fallthru
      _
    // Predicated region
    $region34: #{n_layer_leaky_nac_forward.2} parent=1 // pred_check
      _
    $region35: #{n_layer_leaky_nac_forward.2} parent=1 // pred_check_branch
      %38 = sbr.rel (0) target = $region37
    $region36: #{n_layer_leaky_nac_forward.2} parent=1 // pred_region
      %s40 = ssub.s32 16, 16
      %41 = vsyncadd [#allocation6], %s40
      %s43 = sshll.u32 [#allocation5], 4
      %s44 = int_to_ptr.vmem [resolvable:$true] %s43
      %46 = dma.hbm_to_vmem [thread:$0]  %s8, 16, %s44, [#allocation6]
    $region37: #{n_layer_leaky_nac_forward.2} parent=1 // pred_fallthru
      _
    // Predicated region
    $region38: #{n_layer_leaky_nac_forward.2} parent=1 // pred_check
      _
    $region39: #{n_layer_leaky_nac_forward.2} parent=1 // pred_check_branch
      %48 = sbr.rel (0) target = $region41
    $region40: #{n_layer_leaky_nac_forward.2} parent=1 // pred_region
      %49 = dma.done [#allocation6], 16
    $region41: #{n_layer_leaky_nac_forward.2} parent=1 // pred_fallthru
      _
    %v50 = vld [vmem:[%s0] sm:$0xff]
    %v51 = vld [vmem:[%s0 + $0x8] sm:$0xff]
    %v52 = vld [vmem:[%s0 + $0x10] sm:$0xff]
    %v53 = vld [vmem:[%s0 + $0x18] sm:$0xff]
    %v54 = vld [vmem:[%s0 + $0x20] sm:$0xff]
    %v55 = vld [vmem:[%s0 + $0x28] sm:$0xff]
    %v56 = vld [vmem:[%s0 + $0x30] sm:$0xff]
    %v57 = vld [vmem:[%s0 + $0x38] sm:$0xff]
    %v58 = vtanh.pop %v50
    %v59 = vtanh.pop %v51
    %v60 = vtanh.pop %v52
    %v61 = vtanh.pop %v53
    %v62 = vtanh.pop %v54
    %v63 = vtanh.pop %v55
    %v64 = vtanh.pop %v56
    %v65 = vtanh.pop %v57
    %v66 = vld [vmem:[%s1] sm:$0xff]
    %v67 = vld [vmem:[%s1 + $0x8] sm:$0xff]
    %v68 = vld [vmem:[%s1 + $0x10] sm:$0xff]
    %v69 = vld [vmem:[%s1 + $0x18] sm:$0xff]
    %v70 = vld [vmem:[%s1 + $0x20] sm:$0xff]
    %v71 = vld [vmem:[%s1 + $0x28] sm:$0xff]
    %v72 = vld [vmem:[%s1 + $0x30] sm:$0xff]
    %v73 = vld [vmem:[%s1 + $0x38] sm:$0xff]
    %v74 = vxor.u32 %v66, 2147483648
    %v75 = vxor.u32 %v67, 2147483648
    %v76 = vxor.u32 %v68, 2147483648
    %v77 = vxor.u32 %v69, 2147483648
    %v78 = vxor.u32 %v70, 2147483648
    %v79 = vxor.u32 %v71, 2147483648
    %v80 = vxor.u32 %v72, 2147483648
    %v81 = vxor.u32 %v73, 2147483648
    %v82 = vmul.f32 %v74, 1.442695
    %v83 = vpow.pop %v82
    %v84 = vmul.f32 %v75, 1.442695
    %v85 = vpow.pop %v84
    %v86 = vmul.f32 %v76, 1.442695
    %v87 = vpow.pop %v86
    %v88 = vmul.f32 %v77, 1.442695
    %v89 = vpow.pop %v88
    %v90 = vmul.f32 %v78, 1.442695
    %v91 = vpow.pop %v90
    %v92 = vmul.f32 %v79, 1.442695
    %v93 = vpow.pop %v92
    %v94 = vmul.f32 %v80, 1.442695
    %v95 = vpow.pop %v94
    %v96 = vmul.f32 %v81, 1.442695
    %v97 = vpow.pop %v96
    %v98 = vadd.f32 %v83, 1.0
    %v99 = vadd.f32 %v85, 1.0
    %v100 = vadd.f32 %v87, 1.0
    %v101 = vadd.f32 %v89, 1.0
    %v102 = vadd.f32 %v91, 1.0
    %v103 = vadd.f32 %v93, 1.0
    %v104 = vadd.f32 %v95, 1.0
    %v105 = vadd.f32 %v97, 1.0
    %v106 = vrcp.pop %v98
    %v107 = vmul.f32 1.0, %v106
    %v108 = vrcp.pop %v99
    %v109 = vmul.f32 1.0, %v108
    %v110 = vrcp.pop %v100
    %v111 = vmul.f32 1.0, %v110
    %v112 = vrcp.pop %v101
    %v113 = vmul.f32 1.0, %v112
    %v114 = vrcp.pop %v102
    %v115 = vmul.f32 1.0, %v114
    %v116 = vrcp.pop %v103
    %v117 = vmul.f32 1.0, %v116
    %v118 = vrcp.pop %v104
    %v119 = vmul.f32 1.0, %v118
    %v120 = vrcp.pop %v105
    %v121 = vmul.f32 1.0, %v120
    %v122 = vmul.f32 %v58, %v107
    %v123 = vmul.f32 %v59, %v109
    %v124 = vmul.f32 %v60, %v111
    %v125 = vmul.f32 %v61, %v113
    %v126 = vmul.f32 %v62, %v115
    %v127 = vmul.f32 %v63, %v117
    %v128 = vmul.f32 %v64, %v119
    %v129 = vmul.f32 %v65, %v121
    %130 = vst [vmem:[#allocation2] sm:$0xff] 0.0
    %131 = vst [vmem:[#allocation2 + $0x8] sm:$0xff] 0.0
    %132 = vst [vmem:[#allocation2 + $0x10] sm:$0xff] 0.0
    %133 = vst [vmem:[#allocation2 + $0x18] sm:$0xff] 0.0
    %134 = vst [vmem:[#allocation2 + $0x20] sm:$0xff] 0.0
    %135 = vst [vmem:[#allocation2 + $0x28] sm:$0xff] 0.0
    %136 = vst [vmem:[#allocation2 + $0x30] sm:$0xff] 0.0
    %137 = vst [vmem:[#allocation2 + $0x38] sm:$0xff] 0.0
    %138 = vst [vmem:[#allocation2 + $0x40] sm:$0xff] 0.0
    %139 = vst [vmem:[#allocation2 + $0x48] sm:$0xff] 0.0
    %140 = vst [vmem:[#allocation2 + $0x50] sm:$0xff] 0.0
    %141 = vst [vmem:[#allocation2 + $0x58] sm:$0xff] 0.0
    %142 = vst [vmem:[#allocation2 + $0x60] sm:$0xff] 0.0
    %143 = vst [vmem:[#allocation2 + $0x68] sm:$0xff] 0.0
    %144 = vst [vmem:[#allocation2 + $0x70] sm:$0xff] 0.0
    %145 = vst [vmem:[#allocation2 + $0x78] sm:$0xff] 0.0
    %vm146 = vcmask 261120
    %147 = vst.msk [vmem:[#allocation2] sm:$0xff] %vm146, %v122
    %148 = vst.msk [vmem:[#allocation2 + $0x8] sm:$0xff] %vm146, %v123
    %149 = vst.msk [vmem:[#allocation2 + $0x10] sm:$0xff] %vm146, %v124
    %150 = vst.msk [vmem:[#allocation2 + $0x18] sm:$0xff] %vm146, %v125
    %151 = vst.msk [vmem:[#allocation2 + $0x20] sm:$0xff] %vm146, %v126
    %152 = vst.msk [vmem:[#allocation2 + $0x28] sm:$0xff] %vm146, %v127
    %153 = vst.msk [vmem:[#allocation2 + $0x30] sm:$0xff] %vm146, %v128
    %154 = vst.msk [vmem:[#allocation2 + $0x38] sm:$0xff] %vm146, %v129
    %v155 = vld [vmem:[#allocation2] sm:$0xff]
    %v156 = vld [vmem:[#allocation2 + $0x8] sm:$0xff]
    %v157 = vld [vmem:[#allocation2 + $0x10] sm:$0xff]
    %v158 = vld [vmem:[#allocation2 + $0x18] sm:$0xff]
    %v159 = vld [vmem:[#allocation2 + $0x20] sm:$0xff]
    %v160 = vld [vmem:[#allocation2 + $0x28] sm:$0xff]
    %v161 = vld [vmem:[#allocation2 + $0x30] sm:$0xff]
    %v162 = vld [vmem:[#allocation2 + $0x38] sm:$0xff]
    %v163 = vld [vmem:[#allocation2 + $0x40] sm:$0xff]
    %v164 = vld [vmem:[#allocation2 + $0x48] sm:$0xff]
    %v165 = vld [vmem:[#allocation2 + $0x50] sm:$0xff]
    %v166 = vld [vmem:[#allocation2 + $0x58] sm:$0xff]
    %v167 = vld [vmem:[#allocation2 + $0x60] sm:$0xff]
    %v168 = vld [vmem:[#allocation2 + $0x68] sm:$0xff]
    %v169 = vld [vmem:[#allocation2 + $0x70] sm:$0xff]
    %v170 = vld [vmem:[#allocation2 + $0x78] sm:$0xff]
    %171 = vxpose.xlu0.b32.start [1/16] %v155, 128
    %172 = vxpose.xlu0.b32.cont [2/16] %v156, 128
    %173 = vxpose.xlu0.b32.cont [3/16] %v157, 128
    %174 = vxpose.xlu0.b32.cont [4/16] %v158, 128
    %175 = vxpose.xlu0.b32.cont [5/16] %v159, 128
    %176 = vxpose.xlu0.b32.cont [6/16] %v160, 128
    %177 = vxpose.xlu0.b32.cont [7/16] %v161, 128
    %178 = vxpose.xlu0.b32.cont [8/16] %v162, 128
    %179 = vxpose.xlu0.b32.cont [9/16] %v163, 128
    %180 = vxpose.xlu0.b32.cont [10/16] %v164, 128
    %181 = vxpose.xlu0.b32.cont [11/16] %v165, 128
    %182 = vxpose.xlu0.b32.cont [12/16] %v166, 128
    %183 = vxpose.xlu0.b32.cont [13/16] %v167, 128
    %184 = vxpose.xlu0.b32.cont [14/16] %v168, 128
    %185 = vxpose.xlu0.b32.cont [15/16] %v169, 128
    %186 = vxpose.xlu0.b32.end [16/16] %v170, 128
    %v187 = vpop.trf.xlu0
    %v188 = vpop.trf.xlu0
    %v189 = vpop.trf.xlu0
    %v190 = vpop.trf.xlu0
    %v191 = vpop.trf.xlu0
    %v192 = vpop.trf.xlu0
    %v193 = vpop.trf.xlu0
    %v194 = vpop.trf.xlu0
    %v195 = vpop.trf.xlu0
    %v196 = vpop.trf.xlu0
    %v197 = vpop.trf.xlu0
    %v198 = vpop.trf.xlu0
    %v199 = vpop.trf.xlu0
    %v200 = vpop.trf.xlu0
    %v201 = vpop.trf.xlu0
    %v202 = vpop.trf.xlu0
    %203 = vst [vmem:[%s9] sm:$0xff] %v187
    %204 = vst [vmem:[%s9 + $0x8] sm:$0xff] %v188
    %205 = vst [vmem:[%s9 + $0x10] sm:$0xff] %v189
    %206 = vst [vmem:[%s9 + $0x18] sm:$0xff] %v190
    %207 = vst [vmem:[%s9 + $0x20] sm:$0xff] %v191
    %208 = vst [vmem:[%s9 + $0x28] sm:$0xff] %v192
    %209 = vst [vmem:[%s9 + $0x30] sm:$0xff] %v193
    %210 = vst [vmem:[%s9 + $0x38] sm:$0xff] %v194
    %211 = vst [vmem:[%s9 + $0x40] sm:$0xff] %v195
    %212 = vst [vmem:[%s9 + $0x48] sm:$0xff] %v196
    %213 = vst [vmem:[%s9 + $0x50] sm:$0xff] %v197
    %214 = vst [vmem:[%s9 + $0x58] sm:$0xff] %v198
    %215 = vst [vmem:[%s9 + $0x60] sm:$0xff] %v199
    %216 = vst [vmem:[%s9 + $0x68] sm:$0xff] %v200
    %217 = vst [vmem:[%s9 + $0x70] sm:$0xff] %v201
    %218 = vst [vmem:[%s9 + $0x78] sm:$0xff] %v202
    %219 = vst [vmem:[%s10] sm:$0x1] 0.0
    %v220 = vld [vmem:[%s2] sm:$0x1]
    %vm221 = vcmask 253952
    %222 = vst.msk [vmem:[%s10] sm:$0x1] %vm221, %v220
    %v223 = vld [vmem:[%s3] sm:$0xff]
    %v224 = vld [vmem:[%s3 + $0x8] sm:$0xff]
    %v225 = vld [vmem:[%s3 + $0x10] sm:$0xff]
    %v226 = vld [vmem:[%s3 + $0x18] sm:$0xff]
    %v227 = vld [vmem:[%s3 + $0x20] sm:$0xff]
    %v228 = vld [vmem:[%s3 + $0x28] sm:$0xff]
    %v229 = vld [vmem:[%s3 + $0x30] sm:$0xff]
    %v230 = vld [vmem:[%s3 + $0x38] sm:$0xff]
    %v231 = vtanh.pop %v223
    %v232 = vtanh.pop %v224
    %v233 = vtanh.pop %v225
    %v234 = vtanh.pop %v226
    %v235 = vtanh.pop %v227
    %v236 = vtanh.pop %v228
    %v237 = vtanh.pop %v229
    %v238 = vtanh.pop %v230
    %v239 = vld [vmem:[%s4] sm:$0xff]
    %v240 = vld [vmem:[%s4 + $0x8] sm:$0xff]
    %v241 = vld [vmem:[%s4 + $0x10] sm:$0xff]
    %v242 = vld [vmem:[%s4 + $0x18] sm:$0xff]
    %v243 = vld [vmem:[%s4 + $0x20] sm:$0xff]
    %v244 = vld [vmem:[%s4 + $0x28] sm:$0xff]
    %v245 = vld [vmem:[%s4 + $0x30] sm:$0xff]
    %v246 = vld [vmem:[%s4 + $0x38] sm:$0xff]
    %v247 = vxor.u32 %v239, 2147483648
    %v248 = vxor.u32 %v240, 2147483648
    %v249 = vxor.u32 %v241, 2147483648
    %v250 = vxor.u32 %v242, 2147483648
    %v251 = vxor.u32 %v243, 2147483648
    %v252 = vxor.u32 %v244, 2147483648
    %v253 = vxor.u32 %v245, 2147483648
    %v254 = vxor.u32 %v246, 2147483648
    %v255 = vmul.f32 %v247, 1.442695
    %v256 = vpow.pop %v255
    %v257 = vmul.f32 %v248, 1.442695
    %v258 = vpow.pop %v257
    %v259 = vmul.f32 %v249, 1.442695
    %v260 = vpow.pop %v259
    %v261 = vmul.f32 %v250, 1.442695
    %v262 = vpow.pop %v261
    %v263 = vmul.f32 %v251, 1.442695
    %v264 = vpow.pop %v263
    %v265 = vmul.f32 %v252, 1.442695
    %v266 = vpow.pop %v265
    %v267 = vmul.f32 %v253, 1.442695
    %v268 = vpow.pop %v267
    %v269 = vmul.f32 %v254, 1.442695
    %v270 = vpow.pop %v269
    %v271 = vadd.f32 %v256, 1.0
    %v272 = vadd.f32 %v258, 1.0
    %v273 = vadd.f32 %v260, 1.0
    %v274 = vadd.f32 %v262, 1.0
    %v275 = vadd.f32 %v264, 1.0
    %v276 = vadd.f32 %v266, 1.0
    %v277 = vadd.f32 %v268, 1.0
    %v278 = vadd.f32 %v270, 1.0
    %v279 = vrcp.pop %v271
    %v280 = vmul.f32 1.0, %v279
    %v281 = vrcp.pop %v272
    %v282 = vmul.f32 1.0, %v281
    %v283 = vrcp.pop %v273
    %v284 = vmul.f32 1.0, %v283
    %v285 = vrcp.pop %v274
    %v286 = vmul.f32 1.0, %v285
    %v287 = vrcp.pop %v275
    %v288 = vmul.f32 1.0, %v287
    %v289 = vrcp.pop %v276
    %v290 = vmul.f32 1.0, %v289
    %v291 = vrcp.pop %v277
    %v292 = vmul.f32 1.0, %v291
    %v293 = vrcp.pop %v278
    %v294 = vmul.f32 1.0, %v293
    %v295 = vmul.f32 %v231, %v280
    %v296 = vmul.f32 %v232, %v282
    %v297 = vmul.f32 %v233, %v284
    %v298 = vmul.f32 %v234, %v286
    %v299 = vmul.f32 %v235, %v288
    %v300 = vmul.f32 %v236, %v290
    %v301 = vmul.f32 %v237, %v292
    %v302 = vmul.f32 %v238, %v294
    %303 = vst [vmem:[#allocation3] sm:$0xff] 0.0
    %304 = vst [vmem:[#allocation3 + $0x8] sm:$0xff] 0.0
    %305 = vst [vmem:[#allocation3 + $0x10] sm:$0xff] 0.0
    %306 = vst [vmem:[#allocation3 + $0x18] sm:$0xff] 0.0
    %307 = vst [vmem:[#allocation3 + $0x20] sm:$0xff] 0.0
    %308 = vst [vmem:[#allocation3 + $0x28] sm:$0xff] 0.0
    %309 = vst [vmem:[#allocation3 + $0x30] sm:$0xff] 0.0
    %310 = vst [vmem:[#allocation3 + $0x38] sm:$0xff] 0.0
    %311 = vst [vmem:[#allocation3 + $0x40] sm:$0xff] 0.0
    %312 = vst [vmem:[#allocation3 + $0x48] sm:$0xff] 0.0
    %313 = vst [vmem:[#allocation3 + $0x50] sm:$0xff] 0.0
    %314 = vst [vmem:[#allocation3 + $0x58] sm:$0xff] 0.0
    %315 = vst [vmem:[#allocation3 + $0x60] sm:$0xff] 0.0
    %316 = vst [vmem:[#allocation3 + $0x68] sm:$0xff] 0.0
    %317 = vst [vmem:[#allocation3 + $0x70] sm:$0xff] 0.0
    %318 = vst [vmem:[#allocation3 + $0x78] sm:$0xff] 0.0
    %vm319 = vcmask 523264
    %320 = vst.msk [vmem:[#allocation3] sm:$0xff] %vm319, %v295
    %321 = vst.msk [vmem:[#allocation3 + $0x8] sm:$0xff] %vm319, %v296
    %322 = vst.msk [vmem:[#allocation3 + $0x10] sm:$0xff] %vm319, %v297
    %323 = vst.msk [vmem:[#allocation3 + $0x18] sm:$0xff] %vm319, %v298
    %324 = vst.msk [vmem:[#allocation3 + $0x20] sm:$0xff] %vm319, %v299
    %325 = vst.msk [vmem:[#allocation3 + $0x28] sm:$0xff] %vm319, %v300
    %326 = vst.msk [vmem:[#allocation3 + $0x30] sm:$0xff] %vm319, %v301
    %327 = vst.msk [vmem:[#allocation3 + $0x38] sm:$0xff] %vm319, %v302
    %v328 = vld [vmem:[#allocation3] sm:$0xff]
    %v329 = vld [vmem:[#allocation3 + $0x8] sm:$0xff]
    %v330 = vld [vmem:[#allocation3 + $0x10] sm:$0xff]
    %v331 = vld [vmem:[#allocation3 + $0x18] sm:$0xff]
    %v332 = vld [vmem:[#allocation3 + $0x20] sm:$0xff]
    %v333 = vld [vmem:[#allocation3 + $0x28] sm:$0xff]
    %v334 = vld [vmem:[#allocation3 + $0x30] sm:$0xff]
    %v335 = vld [vmem:[#allocation3 + $0x38] sm:$0xff]
    %v336 = vld [vmem:[#allocation3 + $0x40] sm:$0xff]
    %v337 = vld [vmem:[#allocation3 + $0x48] sm:$0xff]
    %v338 = vld [vmem:[#allocation3 + $0x50] sm:$0xff]
    %v339 = vld [vmem:[#allocation3 + $0x58] sm:$0xff]
    %v340 = vld [vmem:[#allocation3 + $0x60] sm:$0xff]
    %v341 = vld [vmem:[#allocation3 + $0x68] sm:$0xff]
    %v342 = vld [vmem:[#allocation3 + $0x70] sm:$0xff]
    %v343 = vld [vmem:[#allocation3 + $0x78] sm:$0xff]
    %344 = vxpose.xlu0.b32.start [1/16] %v328, 128
    %345 = vxpose.xlu0.b32.cont [2/16] %v329, 128
    %346 = vxpose.xlu0.b32.cont [3/16] %v330, 128
    %347 = vxpose.xlu0.b32.cont [4/16] %v331, 128
    %348 = vxpose.xlu0.b32.cont [5/16] %v332, 128
    %349 = vxpose.xlu0.b32.cont [6/16] %v333, 128
    %350 = vxpose.xlu0.b32.cont [7/16] %v334, 128
    %351 = vxpose.xlu0.b32.cont [8/16] %v335, 128
    %352 = vxpose.xlu0.b32.cont [9/16] %v336, 128
    %353 = vxpose.xlu0.b32.cont [10/16] %v337, 128
    %354 = vxpose.xlu0.b32.cont [11/16] %v338, 128
    %355 = vxpose.xlu0.b32.cont [12/16] %v339, 128
    %356 = vxpose.xlu0.b32.cont [13/16] %v340, 128
    %357 = vxpose.xlu0.b32.cont [14/16] %v341, 128
    %358 = vxpose.xlu0.b32.cont [15/16] %v342, 128
    %359 = vxpose.xlu0.b32.end [16/16] %v343, 128
    %v360 = vpop.trf.xlu0
    %v361 = vpop.trf.xlu0
    %v362 = vpop.trf.xlu0
    %v363 = vpop.trf.xlu0
    %v364 = vpop.trf.xlu0
    %v365 = vpop.trf.xlu0
    %v366 = vpop.trf.xlu0
    %v367 = vpop.trf.xlu0
    %v368 = vpop.trf.xlu0
    %v369 = vpop.trf.xlu0
    %v370 = vpop.trf.xlu0
    %v371 = vpop.trf.xlu0
    %v372 = vpop.trf.xlu0
    %v373 = vpop.trf.xlu0
    %v374 = vpop.trf.xlu0
    %v375 = vpop.trf.xlu0
    %376 = vst [vmem:[%s11] sm:$0xff] %v360
    %377 = vst [vmem:[%s11 + $0x8] sm:$0xff] %v361
    %378 = vst [vmem:[%s11 + $0x10] sm:$0xff] %v362
    %379 = vst [vmem:[%s11 + $0x18] sm:$0xff] %v363
    %380 = vst [vmem:[%s11 + $0x20] sm:$0xff] %v364
    %381 = vst [vmem:[%s11 + $0x28] sm:$0xff] %v365
    %382 = vst [vmem:[%s11 + $0x30] sm:$0xff] %v366
    %383 = vst [vmem:[%s11 + $0x38] sm:$0xff] %v367
    %384 = vst [vmem:[%s11 + $0x40] sm:$0xff] %v368
    %385 = vst [vmem:[%s11 + $0x48] sm:$0xff] %v369
    %386 = vst [vmem:[%s11 + $0x50] sm:$0xff] %v370
    %387 = vst [vmem:[%s11 + $0x58] sm:$0xff] %v371
    %388 = vst [vmem:[%s11 + $0x60] sm:$0xff] %v372
    %389 = vst [vmem:[%s11 + $0x68] sm:$0xff] %v373
    %390 = vst [vmem:[%s11 + $0x70] sm:$0xff] %v374
    %391 = vst [vmem:[%s11 + $0x78] sm:$0xff] %v375
    %392 = vst [vmem:[%s12] sm:$0x1] 0.0
    %v393 = vld [vmem:[%s5] sm:$0x1]
    %vm394 = vcmask 516096
    %395 = vst.msk [vmem:[%s12] sm:$0x1] %vm394, %v393
    %v396 = vld [vmem:[%s6] sm:$0xff]
    %v397 = vld [vmem:[%s6 + $0x8] sm:$0xff]
    %v398 = vtanh.pop %v396
    %v399 = vtanh.pop %v397
    %v400 = vld [vmem:[%s7] sm:$0xff]
    %v401 = vld [vmem:[%s7 + $0x8] sm:$0xff]
    %v402 = vxor.u32 %v400, 2147483648
    %v403 = vxor.u32 %v401, 2147483648
    %v404 = vmul.f32 %v402, 1.442695
    %v405 = vpow.pop %v404
    %v406 = vmul.f32 %v403, 1.442695
    %v407 = vpow.pop %v406
    %v408 = vadd.f32 %v405, 1.0
    %v409 = vadd.f32 %v407, 1.0
    %v410 = vrcp.pop %v408
    %v411 = vmul.f32 1.0, %v410
    %v412 = vrcp.pop %v409
    %v413 = vmul.f32 1.0, %v412
    %v414 = vmul.f32 %v398, %v411
    %v415 = vmul.f32 %v399, %v413
    %416 = vst [vmem:[#allocation4] sm:$0xff] 0.0
    %417 = vst [vmem:[#allocation4 + $0x8] sm:$0xff] 0.0
    %418 = vst [vmem:[#allocation4 + $0x10] sm:$0xff] 0.0
    %419 = vst [vmem:[#allocation4 + $0x18] sm:$0xff] 0.0
    %420 = vst [vmem:[#allocation4 + $0x20] sm:$0xff] 0.0
    %421 = vst [vmem:[#allocation4 + $0x28] sm:$0xff] 0.0
    %422 = vst [vmem:[#allocation4 + $0x30] sm:$0xff] 0.0
    %423 = vst [vmem:[#allocation4 + $0x38] sm:$0xff] 0.0
    %424 = vst [vmem:[#allocation4 + $0x40] sm:$0xff] 0.0
    %425 = vst [vmem:[#allocation4 + $0x48] sm:$0xff] 0.0
    %426 = vst [vmem:[#allocation4 + $0x50] sm:$0xff] 0.0
    %427 = vst [vmem:[#allocation4 + $0x58] sm:$0xff] 0.0
    %428 = vst [vmem:[#allocation4 + $0x60] sm:$0xff] 0.0
    %429 = vst [vmem:[#allocation4 + $0x68] sm:$0xff] 0.0
    %430 = vst [vmem:[#allocation4 + $0x70] sm:$0xff] 0.0
    %431 = vst [vmem:[#allocation4 + $0x78] sm:$0xff] 0.0
    %432 = vst.msk [vmem:[#allocation4] sm:$0xff] %vm319, %v414
    %433 = vst.msk [vmem:[#allocation4 + $0x8] sm:$0xff] %vm319, %v415
    %v434 = vld [vmem:[#allocation4] sm:$0xff]
    %v435 = vld [vmem:[#allocation4 + $0x8] sm:$0xff]
    %v436 = vld [vmem:[#allocation4 + $0x10] sm:$0xff]
    %v437 = vld [vmem:[#allocation4 + $0x18] sm:$0xff]
    %v438 = vld [vmem:[#allocation4 + $0x20] sm:$0xff]
    %v439 = vld [vmem:[#allocation4 + $0x28] sm:$0xff]
    %v440 = vld [vmem:[#allocation4 + $0x30] sm:$0xff]
    %v441 = vld [vmem:[#allocation4 + $0x38] sm:$0xff]
    %v442 = vld [vmem:[#allocation4 + $0x40] sm:$0xff]
    %v443 = vld [vmem:[#allocation4 + $0x48] sm:$0xff]
    %v444 = vld [vmem:[#allocation4 + $0x50] sm:$0xff]
    %v445 = vld [vmem:[#allocation4 + $0x58] sm:$0xff]
    %v446 = vld [vmem:[#allocation4 + $0x60] sm:$0xff]
    %v447 = vld [vmem:[#allocation4 + $0x68] sm:$0xff]
    %v448 = vld [vmem:[#allocation4 + $0x70] sm:$0xff]
    %v449 = vld [vmem:[#allocation4 + $0x78] sm:$0xff]
    %450 = vxpose.xlu0.b32.start [1/16] %v434, 128
    %451 = vxpose.xlu0.b32.cont [2/16] %v435, 128
    %452 = vxpose.xlu0.b32.cont [3/16] %v436, 128
    %453 = vxpose.xlu0.b32.cont [4/16] %v437, 128
    %454 = vxpose.xlu0.b32.cont [5/16] %v438, 128
    %455 = vxpose.xlu0.b32.cont [6/16] %v439, 128
    %456 = vxpose.xlu0.b32.cont [7/16] %v440, 128
    %457 = vxpose.xlu0.b32.cont [8/16] %v441, 128
    %458 = vxpose.xlu0.b32.cont [9/16] %v442, 128
    %459 = vxpose.xlu0.b32.cont [10/16] %v443, 128
    %460 = vxpose.xlu0.b32.cont [11/16] %v444, 128
    %461 = vxpose.xlu0.b32.cont [12/16] %v445, 128
    %462 = vxpose.xlu0.b32.cont [13/16] %v446, 128
    %463 = vxpose.xlu0.b32.cont [14/16] %v447, 128
    %464 = vxpose.xlu0.b32.cont [15/16] %v448, 128
    %465 = vxpose.xlu0.b32.end [16/16] %v449, 128
    %v466 = vpop.trf.xlu0
    %v467 = vpop.trf.xlu0
    %v468 = vpop.trf.xlu0
    %v469 = vpop.trf.xlu0
    %v470 = vpop.trf.xlu0
    %v471 = vpop.trf.xlu0
    %v472 = vpop.trf.xlu0
    %v473 = vpop.trf.xlu0
    %v474 = vpop.trf.xlu0
    %v475 = vpop.trf.xlu0
    %v476 = vpop.trf.xlu0
    %v477 = vpop.trf.xlu0
    %v478 = vpop.trf.xlu0
    %v479 = vpop.trf.xlu0
    %v480 = vpop.trf.xlu0
    %v481 = vpop.trf.xlu0
    %482 = vst [vmem:[%s13] sm:$0xff] %v466
    %483 = vst [vmem:[%s13 + $0x8] sm:$0xff] %v467
    %484 = vst [vmem:[%s13 + $0x10] sm:$0xff] %v468
    %485 = vst [vmem:[%s13 + $0x18] sm:$0xff] %v469
    %486 = vst [vmem:[%s13 + $0x20] sm:$0xff] %v470
    %487 = vst [vmem:[%s13 + $0x28] sm:$0xff] %v471
    %488 = vst [vmem:[%s13 + $0x30] sm:$0xff] %v472
    %489 = vst [vmem:[%s13 + $0x38] sm:$0xff] %v473
    %490 = vst [vmem:[%s13 + $0x40] sm:$0xff] %v474
    %491 = vst [vmem:[%s13 + $0x48] sm:$0xff] %v475
    %492 = vst [vmem:[%s13 + $0x50] sm:$0xff] %v476
    %493 = vst [vmem:[%s13 + $0x58] sm:$0xff] %v477
    %494 = vst [vmem:[%s13 + $0x60] sm:$0xff] %v478
    %495 = vst [vmem:[%s13 + $0x68] sm:$0xff] %v479
    %496 = vst [vmem:[%s13 + $0x70] sm:$0xff] %v480
    %497 = vst [vmem:[%s13 + $0x78] sm:$0xff] %v481
    %498 = vst [vmem:[%s14] sm:$0x1] 0.0
    %v499 = vld [vmem:[#allocation5] sm:$0x1]
    %500 = vst.msk [vmem:[%s14] sm:$0x1] %vm394, %v499
    // Predicated region
    $region42: #{n_layer_leaky_nac_forward.2} parent=1 // pred_check
      _
    $region43: #{n_layer_leaky_nac_forward.2} parent=1 // pred_check_branch
      %502 = sbr.rel (0) target = $region45
    $region44: #{n_layer_leaky_nac_forward.2} parent=1 // pred_region
      _
    $region45: #{n_layer_leaky_nac_forward.2} parent=1 // pred_fallthru
      _
    // Predicated region
    $region46: #{n_layer_leaky_nac_forward.2} parent=1 // pred_check
      _
    $region47: #{n_layer_leaky_nac_forward.2} parent=1 // pred_check_branch
      %504 = sbr.rel (0) target = $region49
    $region48: #{n_layer_leaky_nac_forward.2} parent=1 // pred_region
      _
    $region49: #{n_layer_leaky_nac_forward.2} parent=1 // pred_fallthru
      _
    // Predicated region
    $region50: #{n_layer_leaky_nac_forward.2} parent=1 // pred_check
      _
    $region51: #{n_layer_leaky_nac_forward.2} parent=1 // pred_check_branch
      %506 = sbr.rel (0) target = $region53
    $region52: #{n_layer_leaky_nac_forward.2} parent=1 // pred_region
      _
    $region53: #{n_layer_leaky_nac_forward.2} parent=1 // pred_fallthru
      _
    // Predicated region
    $region54: #{n_layer_leaky_nac_forward.2} parent=1 // pred_check
      _
    $region55: #{n_layer_leaky_nac_forward.2} parent=1 // pred_check_branch
      %508 = sbr.rel (0) target = $region57
    $region56: #{n_layer_leaky_nac_forward.2} parent=1 // pred_region
      _
    $region57: #{n_layer_leaky_nac_forward.2} parent=1 // pred_fallthru
      _
    // Predicated region
    $region58: #{n_layer_leaky_nac_forward.2} parent=1 // pred_check
      _
    $region59: #{n_layer_leaky_nac_forward.2} parent=1 // pred_check_branch
      %510 = sbr.rel (0) target = $region61
    $region60: #{n_layer_leaky_nac_forward.2} parent=1 // pred_region
      _
    $region61: #{n_layer_leaky_nac_forward.2} parent=1 // pred_fallthru
      _
    // Predicated region
    $region62: #{n_layer_leaky_nac_forward.2} parent=1 // pred_check
      _
    $region63: #{n_layer_leaky_nac_forward.2} parent=1 // pred_check_branch
      %512 = sbr.rel (0) target = $region65
    $region64: #{n_layer_leaky_nac_forward.2} parent=1 // pred_region
      _
    $region65: #{n_layer_leaky_nac_forward.2} parent=1 // pred_fallthru
      _
    // Predicated region
    $region66: #{n_layer_leaky_nac_forward.2} parent=1 // pred_check
      _
    $region67: #{n_layer_leaky_nac_forward.2} parent=1 // pred_check_branch
      %514 = sbr.rel (0) target = $region69
    $region68: #{n_layer_leaky_nac_forward.2} parent=1 // pred_region
      _
    $region69: #{n_layer_leaky_nac_forward.2} parent=1 // pred_fallthru
      _
    // Predicated region
    $region70: #{n_layer_leaky_nac_forward.2} parent=1 // pred_check
      _
    $region71: #{n_layer_leaky_nac_forward.2} parent=1 // pred_check_branch
      %516 = sbr.rel (0) target = $region73
    $region72: #{n_layer_leaky_nac_forward.2} parent=1 // pred_region
      _
    $region73: #{n_layer_leaky_nac_forward.2} parent=1 // pred_fallthru
      _
    // Predicated region
    $region74: #{n_layer_leaky_nac_forward.2} parent=1 // pred_check
      _
    $region75: #{n_layer_leaky_nac_forward.2} parent=1 // pred_check_branch
      %518 = sbr.rel (0) target = $region77
    $region76: #{n_layer_leaky_nac_forward.2} parent=1 // pred_region
      _
    $region77: #{n_layer_leaky_nac_forward.2} parent=1 // pred_fallthru
      _
    // Predicated region
    $region78: #{n_layer_leaky_nac_forward.2} parent=1 // pred_check
      _
    $region79: #{n_layer_leaky_nac_forward.2} parent=1 // pred_check_branch
      %520 = sbr.rel (0) target = $region81
    $region80: #{n_layer_leaky_nac_forward.2} parent=1 // pred_region
      _
    $region81: #{n_layer_leaky_nac_forward.2} parent=1 // pred_fallthru
      _
    // Predicated region
    $region82: #{n_layer_leaky_nac_forward.2} parent=1 // pred_check
      _
    $region83: #{n_layer_leaky_nac_forward.2} parent=1 // pred_check_branch
      %522 = sbr.rel (0) target = $region85
    $region84: #{n_layer_leaky_nac_forward.2} parent=1 // pred_region
      _
    $region85: #{n_layer_leaky_nac_forward.2} parent=1 // pred_fallthru
      _
    // Predicated region
    $region86: #{n_layer_leaky_nac_forward.2} parent=1 // pred_check
      _
    $region87: #{n_layer_leaky_nac_forward.2} parent=1 // pred_check_branch
      %524 = sbr.rel (0) target = $region89
    $region88: #{n_layer_leaky_nac_forward.2} parent=1 // pred_region
      _
    $region89: #{n_layer_leaky_nac_forward.2} parent=1 // pred_fallthru
      _
    %525 = vsyncpa [#allocation6], 1

// kernel: n_layer_leaky_nac_forward.3
$region0: #{n_layer_leaky_nac_forward.3}
  #allocation0 [shape = 'u32[]', space=smem, size = 0x4, offset = 0x4, fixed_abs, tag = 'smem constant byte address 0x4 - core index']
  #allocation1 [shape = 'u32[144,128]{1,0:T(1,128)}', space=vmem, size = 0x12000, scoped, tag = 'internal scratch']
  %s0 = inlined_call_operand.vmem [shape: f32[8,128], index: 0, kind: input, shape index: {}]
  %s1 = inlined_call_operand.vmem [shape: f32[128,128], index: 1, kind: input, shape index: {}]
  %s2 = inlined_call_operand.vmem [shape: f32[1,128], index: 2, kind: input, shape index: {}]
  %s3 = inlined_call_operand.vmem [shape: f32[128,128], index: 3, kind: input, shape index: {}]
  %s4 = inlined_call_operand.vmem [shape: f32[1,128], index: 4, kind: input, shape index: {}]
  %s5 = inlined_call_operand.vmem [shape: f32[128,128], index: 5, kind: input, shape index: {}]
  %s6 = inlined_call_operand.vmem [shape: f32[1,128], index: 6, kind: input, shape index: {}]
  %s7 = inlined_call_operand.hbm [shape: f32[8,128], index: 7, kind: output, shape index: {}]
  %s8 = sld [smem:[#allocation0]]
  $region38: #{n_layer_leaky_nac_forward.3} parent=0
    _
  %s10 = ssub.s32 1, %s8
  %s11 = scalar_select 0, %s10, %s8
  $region1: #{n_layer_leaky_nac_forward.3} parent=0
    #allocation2 [shape = 'u8[4096]{0}', space=vmem, size = 0x1000, scoped, tag = 'output window, operand 0, single buffered']
    #allocation3 [shape = 's32[1]{0}', space=sflag, size = 0x4, scoped, tag = 'scoped memory for n_layer_leaky_nac_forward.3']
    %12 = vsyncpa [#allocation3], 0
    // Predicated region
    $region2: #{n_layer_leaky_nac_forward.3} parent=1 // pred_check
      _
    $region3: #{n_layer_leaky_nac_forward.3} parent=1 // pred_check_branch
      %14 = sbr.rel (0) target = $region5
    $region4: #{n_layer_leaky_nac_forward.3} parent=1 // pred_region
      _
    $region5: #{n_layer_leaky_nac_forward.3} parent=1 // pred_fallthru
      _
    // Predicated region
    $region6: #{n_layer_leaky_nac_forward.3} parent=1 // pred_check
      _
    $region7: #{n_layer_leaky_nac_forward.3} parent=1 // pred_check_branch
      %16 = sbr.rel (0) target = $region9
    $region8: #{n_layer_leaky_nac_forward.3} parent=1 // pred_region
      _
    $region9: #{n_layer_leaky_nac_forward.3} parent=1 // pred_fallthru
      _
    // Predicated region
    $region10: #{n_layer_leaky_nac_forward.3} parent=1 // pred_check
      _
    $region11: #{n_layer_leaky_nac_forward.3} parent=1 // pred_check_branch
      %18 = sbr.rel (0) target = $region13
    $region12: #{n_layer_leaky_nac_forward.3} parent=1 // pred_region
      _
    $region13: #{n_layer_leaky_nac_forward.3} parent=1 // pred_fallthru
      _
    // Predicated region
    $region14: #{n_layer_leaky_nac_forward.3} parent=1 // pred_check
      _
    $region15: #{n_layer_leaky_nac_forward.3} parent=1 // pred_check_branch
      %20 = sbr.rel (0) target = $region17
    $region16: #{n_layer_leaky_nac_forward.3} parent=1 // pred_region
      _
    $region17: #{n_layer_leaky_nac_forward.3} parent=1 // pred_fallthru
      _
    // Predicated region
    $region18: #{n_layer_leaky_nac_forward.3} parent=1 // pred_check
      _
    $region19: #{n_layer_leaky_nac_forward.3} parent=1 // pred_check_branch
      %22 = sbr.rel (0) target = $region21
    $region20: #{n_layer_leaky_nac_forward.3} parent=1 // pred_region
      _
    $region21: #{n_layer_leaky_nac_forward.3} parent=1 // pred_fallthru
      _
    // Predicated region
    $region22: #{n_layer_leaky_nac_forward.3} parent=1 // pred_check
      _
    $region23: #{n_layer_leaky_nac_forward.3} parent=1 // pred_check_branch
      %24 = sbr.rel (0) target = $region25
    $region24: #{n_layer_leaky_nac_forward.3} parent=1 // pred_region
      _
    $region25: #{n_layer_leaky_nac_forward.3} parent=1 // pred_fallthru
      _
    // Predicated region
    $region26: #{n_layer_leaky_nac_forward.3} parent=1 // pred_check
      _
    $region27: #{n_layer_leaky_nac_forward.3} parent=1 // pred_check_branch
      %26 = sbr.rel (0) target = $region29
    $region28: #{n_layer_leaky_nac_forward.3} parent=1 // pred_region
      _
    $region29: #{n_layer_leaky_nac_forward.3} parent=1 // pred_fallthru
      _
    %s27 = smul.u32 0, 8
    %v28 = vlaneseq
    %v29 = vshrl.u32 %v28, 7
    %v30 = vstv %s27
    %v31 = vadd.s32 %v30, %v29
    %vm32 = vcmp.lt.s32.totalorder %v31, 8
    %v33 = vld [vmem:[%s0] sm:$0xff]
    %v34 = vld [vmem:[%s1] sm:$0xff]
    %v35 = vld [vmem:[%s1 + $0x8] sm:$0xff]
    %v36 = vld [vmem:[%s1 + $0x10] sm:$0xff]
    %v37 = vld [vmem:[%s1 + $0x18] sm:$0xff]
    %v38 = vld [vmem:[%s1 + $0x20] sm:$0xff]
    %v39 = vld [vmem:[%s1 + $0x28] sm:$0xff]
    %v40 = vld [vmem:[%s1 + $0x30] sm:$0xff]
    %v41 = vld [vmem:[%s1 + $0x38] sm:$0xff]
    %v42 = vld [vmem:[%s1 + $0x40] sm:$0xff]
    %v43 = vld [vmem:[%s1 + $0x48] sm:$0xff]
    %v44 = vld [vmem:[%s1 + $0x50] sm:$0xff]
    %v45 = vld [vmem:[%s1 + $0x58] sm:$0xff]
    %v46 = vld [vmem:[%s1 + $0x60] sm:$0xff]
    %v47 = vld [vmem:[%s1 + $0x68] sm:$0xff]
    %v48 = vld [vmem:[%s1 + $0x70] sm:$0xff]
    %v49 = vld [vmem:[%s1 + $0x78] sm:$0xff]
    %v50 = vld [vmem:[%s2] sm:$0x1]
    %v51 = vand.u32 2147483647, %v33
    %v52 = vadd.f32 %v51, 1e-06
    %v53 = vlog2.pop %v52
    %v54 = vmul.f32 %v53, 0.6931472
    %55 = vmatprep.subr.mxu0 0.0
    %56 = vmatpush1.msra.mxu0 %v34
    %57 = vmatprep.subr.mxu0 0.0
    %58 = vmatpush1.msra.mxu0 %v35
    %59 = vmatprep.subr.mxu0 0.0
    %60 = vmatpush1.msra.mxu0 %v36
    %61 = vmatprep.subr.mxu0 0.0
    %62 = vmatpush1.msra.mxu0 %v37
    %63 = vmatprep.subr.mxu0 0.0
    %64 = vmatpush1.msra.mxu0 %v38
    %65 = vmatprep.subr.mxu0 0.0
    %66 = vmatpush1.msra.mxu0 %v39
    %67 = vmatprep.subr.mxu0 0.0
    %68 = vmatpush1.msra.mxu0 %v40
    %69 = vmatprep.subr.mxu0 0.0
    %70 = vmatpush1.msra.mxu0 %v41
    %71 = vmatprep.subr.mxu0 0.0
    %72 = vmatpush1.msra.mxu0 %v42
    %73 = vmatprep.subr.mxu0 0.0
    %74 = vmatpush1.msra.mxu0 %v43
    %75 = vmatprep.subr.mxu0 0.0
    %76 = vmatpush1.msra.mxu0 %v44
    %77 = vmatprep.subr.mxu0 0.0
    %78 = vmatpush1.msra.mxu0 %v45
    %79 = vmatprep.subr.mxu0 0.0
    %80 = vmatpush1.msra.mxu0 %v46
    %81 = vmatprep.subr.mxu0 0.0
    %82 = vmatpush1.msra.mxu0 %v47
    %83 = vmatprep.subr.mxu0 0.0
    %84 = vmatpush1.msra.mxu0 %v48
    %85 = vmatprep.subr.mxu0 0.0
    %86 = vmatpush1.msra.mxu0 %v49
    %87 = vmatprep.subr.mxu0 0.0
    %88 = vmatpush1.msra.mxu0 0.0
    %89 = vmatprep.subr.mxu0 0.0
    %90 = vmatpush1.msra.mxu0 0.0
    %91 = vmatprep.subr.mxu0 0.0
    %92 = vmatpush1.msra.mxu0 0.0
    %93 = vmatprep.subr.mxu0 0.0
    %94 = vmatpush1.msra.mxu0 0.0
    %95 = vmatprep.subr.mxu0 0.0
    %96 = vmatpush1.msra.mxu0 0.0
    %97 = vmatprep.subr.mxu0 0.0
    %98 = vmatpush1.msra.mxu0 0.0
    %99 = vmatprep.subr.mxu0 0.0
    %100 = vmatpush1.msra.mxu0 0.0
    %101 = vmatprep.subr.mxu0 0.0
    %102 = vmatpush1.msra.mxu0 0.0
    %103 = vmatprep.subr.mxu0 0.0
    %104 = vmatpush1.msra.mxu0 0.0
    %105 = vmatprep.subr.mxu0 0.0
    %106 = vmatpush1.msra.mxu0 0.0
    %107 = vmatprep.subr.mxu0 0.0
    %108 = vmatpush1.msra.mxu0 0.0
    %109 = vmatprep.subr.mxu0 0.0
    %110 = vmatpush1.msra.mxu0 0.0
    %111 = vmatprep.subr.mxu0 0.0
    %112 = vmatpush1.msra.mxu0 0.0
    %113 = vmatprep.subr.mxu0 0.0
    %114 = vmatpush1.msra.mxu0 0.0
    %115 = vmatprep.subr.mxu0 0.0
    %116 = vmatpush1.msra.mxu0 0.0
    %117 = vmatprep.subr.mxu0 0.0
    %118 = vmatpush1.msra.mxu0 0.0
    %119 = vmatprep.mubr.f32.mxu0 0.0
    %120 = vmatmul.mubr.f32.gmra.mrb[0].mxu0 %v33
    %v121 = vpop.f32.mrb[0].mxu0
    %v122 = vadd.f32 0.0, %v121
    %v123 = vpop.f32.mrb[0].mxu0
    %124 = vdwg.mxu0
    %125 = vmatprep.subr.mxu0 0.0
    %126 = vmatpush1.msra.mxu0 %v34
    %127 = vmatprep.subr.mxu0 0.0
    %128 = vmatpush1.msra.mxu0 %v35
    %129 = vmatprep.subr.mxu0 0.0
    %130 = vmatpush1.msra.mxu0 %v36
    %131 = vmatprep.subr.mxu0 0.0
    %132 = vmatpush1.msra.mxu0 %v37
    %133 = vmatprep.subr.mxu0 0.0
    %134 = vmatpush1.msra.mxu0 %v38
    %135 = vmatprep.subr.mxu0 0.0
    %136 = vmatpush1.msra.mxu0 %v39
    %137 = vmatprep.subr.mxu0 0.0
    %138 = vmatpush1.msra.mxu0 %v40
    %139 = vmatprep.subr.mxu0 0.0
    %140 = vmatpush1.msra.mxu0 %v41
    %141 = vmatprep.subr.mxu0 0.0
    %142 = vmatpush1.msra.mxu0 %v42
    %143 = vmatprep.subr.mxu0 0.0
    %144 = vmatpush1.msra.mxu0 %v43
    %145 = vmatprep.subr.mxu0 0.0
    %146 = vmatpush1.msra.mxu0 %v44
    %147 = vmatprep.subr.mxu0 0.0
    %148 = vmatpush1.msra.mxu0 %v45
    %149 = vmatprep.subr.mxu0 0.0
    %150 = vmatpush1.msra.mxu0 %v46
    %151 = vmatprep.subr.mxu0 0.0
    %152 = vmatpush1.msra.mxu0 %v47
    %153 = vmatprep.subr.mxu0 0.0
    %154 = vmatpush1.msra.mxu0 %v48
    %155 = vmatprep.subr.mxu0 0.0
    %156 = vmatpush1.msra.mxu0 %v49
    %157 = vmatprep.subr.mxu0 0.0
    %158 = vmatpush1.msra.mxu0 0.0
    %159 = vmatprep.subr.mxu0 0.0
    %160 = vmatpush1.msra.mxu0 0.0
    %161 = vmatprep.subr.mxu0 0.0
    %162 = vmatpush1.msra.mxu0 0.0
    %163 = vmatprep.subr.mxu0 0.0
    %164 = vmatpush1.msra.mxu0 0.0
    %165 = vmatprep.subr.mxu0 0.0
    %166 = vmatpush1.msra.mxu0 0.0
    %167 = vmatprep.subr.mxu0 0.0
    %168 = vmatpush1.msra.mxu0 0.0
    %169 = vmatprep.subr.mxu0 0.0
    %170 = vmatpush1.msra.mxu0 0.0
    %171 = vmatprep.subr.mxu0 0.0
    %172 = vmatpush1.msra.mxu0 0.0
    %173 = vmatprep.subr.mxu0 0.0
    %174 = vmatpush1.msra.mxu0 0.0
    %175 = vmatprep.subr.mxu0 0.0
    %176 = vmatpush1.msra.mxu0 0.0
    %177 = vmatprep.subr.mxu0 0.0
    %178 = vmatpush1.msra.mxu0 0.0
    %179 = vmatprep.subr.mxu0 0.0
    %180 = vmatpush1.msra.mxu0 0.0
    %181 = vmatprep.subr.mxu0 0.0
    %182 = vmatpush1.msra.mxu0 0.0
    %183 = vmatprep.subr.mxu0 0.0
    %184 = vmatpush1.msra.mxu0 0.0
    %185 = vmatprep.subr.mxu0 0.0
    %186 = vmatpush1.msra.mxu0 0.0
    %187 = vmatprep.subr.mxu0 0.0
    %188 = vmatpush1.msra.mxu0 0.0
    %189 = vmatprep.mubr.f32.mxu0 0.0
    %190 = vmatmul.mubr.f32.gmra.mrb[0].mxu0 %v54
    %v191 = vpop.f32.mrb[0].mxu0
    %v192 = vadd.f32 0.0, %v191
    %v193 = vpop.f32.mrb[0].mxu0
    %194 = vdwg.mxu0
    %v195 = vmul.f32 %v192, 1.442695
    %v196 = vpow.pop %v195
    %v198 = vlaneseq
    %v199 = vshrl.u32 %v198, 7
    %v200 = vsub.s32 0, %v199
    %v201 = vrot.slane %v50, %v200
    %v203 = vmul.f32 %v33, %v201
    %204 = vadd.xlane.f32.xlu0 %v203
    %v205 = vpop.xlane.xlu0 %204
    %v206 = vxor.u32 %v205, 2147483648
    %v207 = vmul.f32 %v206, 1.442695
    %v208 = vpow.pop %v207
    %v209 = vadd.f32 %v208, 1.0
    %v210 = vrcp.pop %v209
    %v211 = vmul.f32 1.0, %v210
    %v212 = vsub.f32 %v122, %v196
    %v213 = vmul.f32 %v211, %v212
    %v214 = vadd.f32 %v196, %v213
    %vm215 = vcmp.ge.f32.partialorder %v214, 0.0
    %v216 = vmul.f32 %v214, 0.2
    %v217 = vsel %vm215, %v214, %v216
    %v218 = vsel %vm32, 1, 0
    %vm219 = vcmp.eq.s32.totalorder %v218, 1
    %v220 = vsel %vm219, %v217, 0.0
    %v221 = vld [vmem:[%s3] sm:$0xff]
    %v222 = vld [vmem:[%s3 + $0x8] sm:$0xff]
    %v223 = vld [vmem:[%s3 + $0x10] sm:$0xff]
    %v224 = vld [vmem:[%s3 + $0x18] sm:$0xff]
    %v225 = vld [vmem:[%s3 + $0x20] sm:$0xff]
    %v226 = vld [vmem:[%s3 + $0x28] sm:$0xff]
    %v227 = vld [vmem:[%s3 + $0x30] sm:$0xff]
    %v228 = vld [vmem:[%s3 + $0x38] sm:$0xff]
    %v229 = vld [vmem:[%s3 + $0x40] sm:$0xff]
    %v230 = vld [vmem:[%s3 + $0x48] sm:$0xff]
    %v231 = vld [vmem:[%s3 + $0x50] sm:$0xff]
    %v232 = vld [vmem:[%s3 + $0x58] sm:$0xff]
    %v233 = vld [vmem:[%s3 + $0x60] sm:$0xff]
    %v234 = vld [vmem:[%s3 + $0x68] sm:$0xff]
    %v235 = vld [vmem:[%s3 + $0x70] sm:$0xff]
    %v236 = vld [vmem:[%s3 + $0x78] sm:$0xff]
    %v237 = vld [vmem:[%s4] sm:$0x1]
    %v238 = vand.u32 2147483647, %v220
    %v239 = vadd.f32 %v238, 1e-06
    %v240 = vlog2.pop %v239
    %v241 = vmul.f32 %v240, 0.6931472
    %242 = vmatprep.subr.mxu0 0.0
    %243 = vmatpush1.msra.mxu0 %v221
    %244 = vmatprep.subr.mxu0 0.0
    %245 = vmatpush1.msra.mxu0 %v222
    %246 = vmatprep.subr.mxu0 0.0
    %247 = vmatpush1.msra.mxu0 %v223
    %248 = vmatprep.subr.mxu0 0.0
    %249 = vmatpush1.msra.mxu0 %v224
    %250 = vmatprep.subr.mxu0 0.0
    %251 = vmatpush1.msra.mxu0 %v225
    %252 = vmatprep.subr.mxu0 0.0
    %253 = vmatpush1.msra.mxu0 %v226
    %254 = vmatprep.subr.mxu0 0.0
    %255 = vmatpush1.msra.mxu0 %v227
    %256 = vmatprep.subr.mxu0 0.0
    %257 = vmatpush1.msra.mxu0 %v228
    %258 = vmatprep.subr.mxu0 0.0
    %259 = vmatpush1.msra.mxu0 %v229
    %260 = vmatprep.subr.mxu0 0.0
    %261 = vmatpush1.msra.mxu0 %v230
    %262 = vmatprep.subr.mxu0 0.0
    %263 = vmatpush1.msra.mxu0 %v231
    %264 = vmatprep.subr.mxu0 0.0
    %265 = vmatpush1.msra.mxu0 %v232
    %266 = vmatprep.subr.mxu0 0.0
    %267 = vmatpush1.msra.mxu0 %v233
    %268 = vmatprep.subr.mxu0 0.0
    %269 = vmatpush1.msra.mxu0 %v234
    %270 = vmatprep.subr.mxu0 0.0
    %271 = vmatpush1.msra.mxu0 %v235
    %272 = vmatprep.subr.mxu0 0.0
    %273 = vmatpush1.msra.mxu0 %v236
    %274 = vmatprep.subr.mxu0 0.0
    %275 = vmatpush1.msra.mxu0 0.0
    %276 = vmatprep.subr.mxu0 0.0
    %277 = vmatpush1.msra.mxu0 0.0
    %278 = vmatprep.subr.mxu0 0.0
    %279 = vmatpush1.msra.mxu0 0.0
    %280 = vmatprep.subr.mxu0 0.0
    %281 = vmatpush1.msra.mxu0 0.0
    %282 = vmatprep.subr.mxu0 0.0
    %283 = vmatpush1.msra.mxu0 0.0
    %284 = vmatprep.subr.mxu0 0.0
    %285 = vmatpush1.msra.mxu0 0.0
    %286 = vmatprep.subr.mxu0 0.0
    %287 = vmatpush1.msra.mxu0 0.0
    %288 = vmatprep.subr.mxu0 0.0
    %289 = vmatpush1.msra.mxu0 0.0
    %290 = vmatprep.subr.mxu0 0.0
    %291 = vmatpush1.msra.mxu0 0.0
    %292 = vmatprep.subr.mxu0 0.0
    %293 = vmatpush1.msra.mxu0 0.0
    %294 = vmatprep.subr.mxu0 0.0
    %295 = vmatpush1.msra.mxu0 0.0
    %296 = vmatprep.subr.mxu0 0.0
    %297 = vmatpush1.msra.mxu0 0.0
    %298 = vmatprep.subr.mxu0 0.0
    %299 = vmatpush1.msra.mxu0 0.0
    %300 = vmatprep.subr.mxu0 0.0
    %301 = vmatpush1.msra.mxu0 0.0
    %302 = vmatprep.subr.mxu0 0.0
    %303 = vmatpush1.msra.mxu0 0.0
    %304 = vmatprep.subr.mxu0 0.0
    %305 = vmatpush1.msra.mxu0 0.0
    %306 = vmatprep.mubr.f32.mxu0 0.0
    %307 = vmatmul.mubr.f32.gmra.mrb[0].mxu0 %v220
    %v308 = vpop.f32.mrb[0].mxu0
    %v309 = vadd.f32 0.0, %v308
    %v310 = vpop.f32.mrb[0].mxu0
    %311 = vdwg.mxu0
    %312 = vmatprep.subr.mxu0 0.0
    %313 = vmatpush1.msra.mxu0 %v221
    %314 = vmatprep.subr.mxu0 0.0
    %315 = vmatpush1.msra.mxu0 %v222
    %316 = vmatprep.subr.mxu0 0.0
    %317 = vmatpush1.msra.mxu0 %v223
    %318 = vmatprep.subr.mxu0 0.0
    %319 = vmatpush1.msra.mxu0 %v224
    %320 = vmatprep.subr.mxu0 0.0
    %321 = vmatpush1.msra.mxu0 %v225
    %322 = vmatprep.subr.mxu0 0.0
    %323 = vmatpush1.msra.mxu0 %v226
    %324 = vmatprep.subr.mxu0 0.0
    %325 = vmatpush1.msra.mxu0 %v227
    %326 = vmatprep.subr.mxu0 0.0
    %327 = vmatpush1.msra.mxu0 %v228
    %328 = vmatprep.subr.mxu0 0.0
    %329 = vmatpush1.msra.mxu0 %v229
    %330 = vmatprep.subr.mxu0 0.0
    %331 = vmatpush1.msra.mxu0 %v230
    %332 = vmatprep.subr.mxu0 0.0
    %333 = vmatpush1.msra.mxu0 %v231
    %334 = vmatprep.subr.mxu0 0.0
    %335 = vmatpush1.msra.mxu0 %v232
    %336 = vmatprep.subr.mxu0 0.0
    %337 = vmatpush1.msra.mxu0 %v233
    %338 = vmatprep.subr.mxu0 0.0
    %339 = vmatpush1.msra.mxu0 %v234
    %340 = vmatprep.subr.mxu0 0.0
    %341 = vmatpush1.msra.mxu0 %v235
    %342 = vmatprep.subr.mxu0 0.0
    %343 = vmatpush1.msra.mxu0 %v236
    %344 = vmatprep.subr.mxu0 0.0
    %345 = vmatpush1.msra.mxu0 0.0
    %346 = vmatprep.subr.mxu0 0.0
    %347 = vmatpush1.msra.mxu0 0.0
    %348 = vmatprep.subr.mxu0 0.0
    %349 = vmatpush1.msra.mxu0 0.0
    %350 = vmatprep.subr.mxu0 0.0
    %351 = vmatpush1.msra.mxu0 0.0
    %352 = vmatprep.subr.mxu0 0.0
    %353 = vmatpush1.msra.mxu0 0.0
    %354 = vmatprep.subr.mxu0 0.0
    %355 = vmatpush1.msra.mxu0 0.0
    %356 = vmatprep.subr.mxu0 0.0
    %357 = vmatpush1.msra.mxu0 0.0
    %358 = vmatprep.subr.mxu0 0.0
    %359 = vmatpush1.msra.mxu0 0.0
    %360 = vmatprep.subr.mxu0 0.0
    %361 = vmatpush1.msra.mxu0 0.0
    %362 = vmatprep.subr.mxu0 0.0
    %363 = vmatpush1.msra.mxu0 0.0
    %364 = vmatprep.subr.mxu0 0.0
    %365 = vmatpush1.msra.mxu0 0.0
    %366 = vmatprep.subr.mxu0 0.0
    %367 = vmatpush1.msra.mxu0 0.0
    %368 = vmatprep.subr.mxu0 0.0
    %369 = vmatpush1.msra.mxu0 0.0
    %370 = vmatprep.subr.mxu0 0.0
    %371 = vmatpush1.msra.mxu0 0.0
    %372 = vmatprep.subr.mxu0 0.0
    %373 = vmatpush1.msra.mxu0 0.0
    %374 = vmatprep.subr.mxu0 0.0
    %375 = vmatpush1.msra.mxu0 0.0
    %376 = vmatprep.mubr.f32.mxu0 0.0
    %377 = vmatmul.mubr.f32.gmra.mrb[0].mxu0 %v241
    %v378 = vpop.f32.mrb[0].mxu0
    %v379 = vadd.f32 0.0, %v378
    %v380 = vpop.f32.mrb[0].mxu0
    %381 = vdwg.mxu0
    %v382 = vmul.f32 %v379, 1.442695
    %v383 = vpow.pop %v382
    %v385 = vlaneseq
    %v386 = vshrl.u32 %v385, 7
    %v387 = vsub.s32 0, %v386
    %v388 = vrot.slane %v237, %v387
    %v390 = vmul.f32 %v220, %v388
    %391 = vadd.xlane.f32.xlu0 %v390
    %v392 = vpop.xlane.xlu0 %391
    %v393 = vxor.u32 %v392, 2147483648
    %v394 = vmul.f32 %v393, 1.442695
    %v395 = vpow.pop %v394
    %v396 = vadd.f32 %v395, 1.0
    %v397 = vrcp.pop %v396
    %v398 = vmul.f32 1.0, %v397
    %v399 = vsub.f32 %v309, %v383
    %v400 = vmul.f32 %v398, %v399
    %v401 = vadd.f32 %v383, %v400
    %vm402 = vcmp.ge.f32.partialorder %v401, 0.0
    %v403 = vmul.f32 %v401, 0.2
    %v404 = vsel %vm402, %v401, %v403
    %v405 = vsel %vm219, %v404, 0.0
    %v406 = vld [vmem:[%s5] sm:$0xff]
    %v407 = vld [vmem:[%s5 + $0x8] sm:$0xff]
    %v408 = vld [vmem:[%s5 + $0x10] sm:$0xff]
    %v409 = vld [vmem:[%s5 + $0x18] sm:$0xff]
    %v410 = vld [vmem:[%s5 + $0x20] sm:$0xff]
    %v411 = vld [vmem:[%s5 + $0x28] sm:$0xff]
    %v412 = vld [vmem:[%s5 + $0x30] sm:$0xff]
    %v413 = vld [vmem:[%s5 + $0x38] sm:$0xff]
    %v414 = vld [vmem:[%s5 + $0x40] sm:$0xff]
    %v415 = vld [vmem:[%s5 + $0x48] sm:$0xff]
    %v416 = vld [vmem:[%s5 + $0x50] sm:$0xff]
    %v417 = vld [vmem:[%s5 + $0x58] sm:$0xff]
    %v418 = vld [vmem:[%s5 + $0x60] sm:$0xff]
    %v419 = vld [vmem:[%s5 + $0x68] sm:$0xff]
    %v420 = vld [vmem:[%s5 + $0x70] sm:$0xff]
    %v421 = vld [vmem:[%s5 + $0x78] sm:$0xff]
    %v422 = vld [vmem:[%s6] sm:$0x1]
    %v423 = vand.u32 2147483647, %v405
    %v424 = vadd.f32 %v423, 1e-06
    %v425 = vlog2.pop %v424
    %v426 = vmul.f32 %v425, 0.6931472
    %427 = vmatprep.subr.mxu0 0.0
    %428 = vmatpush1.msra.mxu0 %v406
    %429 = vmatprep.subr.mxu0 0.0
    %430 = vmatpush1.msra.mxu0 %v407
    %431 = vmatprep.subr.mxu0 0.0
    %432 = vmatpush1.msra.mxu0 %v408
    %433 = vmatprep.subr.mxu0 0.0
    %434 = vmatpush1.msra.mxu0 %v409
    %435 = vmatprep.subr.mxu0 0.0
    %436 = vmatpush1.msra.mxu0 %v410
    %437 = vmatprep.subr.mxu0 0.0
    %438 = vmatpush1.msra.mxu0 %v411
    %439 = vmatprep.subr.mxu0 0.0
    %440 = vmatpush1.msra.mxu0 %v412
    %441 = vmatprep.subr.mxu0 0.0
    %442 = vmatpush1.msra.mxu0 %v413
    %443 = vmatprep.subr.mxu0 0.0
    %444 = vmatpush1.msra.mxu0 %v414
    %445 = vmatprep.subr.mxu0 0.0
    %446 = vmatpush1.msra.mxu0 %v415
    %447 = vmatprep.subr.mxu0 0.0
    %448 = vmatpush1.msra.mxu0 %v416
    %449 = vmatprep.subr.mxu0 0.0
    %450 = vmatpush1.msra.mxu0 %v417
    %451 = vmatprep.subr.mxu0 0.0
    %452 = vmatpush1.msra.mxu0 %v418
    %453 = vmatprep.subr.mxu0 0.0
    %454 = vmatpush1.msra.mxu0 %v419
    %455 = vmatprep.subr.mxu0 0.0
    %456 = vmatpush1.msra.mxu0 %v420
    %457 = vmatprep.subr.mxu0 0.0
    %458 = vmatpush1.msra.mxu0 %v421
    %459 = vmatprep.subr.mxu0 0.0
    %460 = vmatpush1.msra.mxu0 0.0
    %461 = vmatprep.subr.mxu0 0.0
    %462 = vmatpush1.msra.mxu0 0.0
    %463 = vmatprep.subr.mxu0 0.0
    %464 = vmatpush1.msra.mxu0 0.0
    %465 = vmatprep.subr.mxu0 0.0
    %466 = vmatpush1.msra.mxu0 0.0
    %467 = vmatprep.subr.mxu0 0.0
    %468 = vmatpush1.msra.mxu0 0.0
    %469 = vmatprep.subr.mxu0 0.0
    %470 = vmatpush1.msra.mxu0 0.0
    %471 = vmatprep.subr.mxu0 0.0
    %472 = vmatpush1.msra.mxu0 0.0
    %473 = vmatprep.subr.mxu0 0.0
    %474 = vmatpush1.msra.mxu0 0.0
    %475 = vmatprep.subr.mxu0 0.0
    %476 = vmatpush1.msra.mxu0 0.0
    %477 = vmatprep.subr.mxu0 0.0
    %478 = vmatpush1.msra.mxu0 0.0
    %479 = vmatprep.subr.mxu0 0.0
    %480 = vmatpush1.msra.mxu0 0.0
    %481 = vmatprep.subr.mxu0 0.0
    %482 = vmatpush1.msra.mxu0 0.0
    %483 = vmatprep.subr.mxu0 0.0
    %484 = vmatpush1.msra.mxu0 0.0
    %485 = vmatprep.subr.mxu0 0.0
    %486 = vmatpush1.msra.mxu0 0.0
    %487 = vmatprep.subr.mxu0 0.0
    %488 = vmatpush1.msra.mxu0 0.0
    %489 = vmatprep.subr.mxu0 0.0
    %490 = vmatpush1.msra.mxu0 0.0
    %491 = vmatprep.mubr.f32.mxu0 0.0
    %492 = vmatmul.mubr.f32.gmra.mrb[0].mxu0 %v405
    %v493 = vpop.f32.mrb[0].mxu0
    %v494 = vadd.f32 0.0, %v493
    %v495 = vpop.f32.mrb[0].mxu0
    %496 = vdwg.mxu0
    %497 = vmatprep.subr.mxu0 0.0
    %498 = vmatpush1.msra.mxu0 %v406
    %499 = vmatprep.subr.mxu0 0.0
    %500 = vmatpush1.msra.mxu0 %v407
    %501 = vmatprep.subr.mxu0 0.0
    %502 = vmatpush1.msra.mxu0 %v408
    %503 = vmatprep.subr.mxu0 0.0
    %504 = vmatpush1.msra.mxu0 %v409
    %505 = vmatprep.subr.mxu0 0.0
    %506 = vmatpush1.msra.mxu0 %v410
    %507 = vmatprep.subr.mxu0 0.0
    %508 = vmatpush1.msra.mxu0 %v411
    %509 = vmatprep.subr.mxu0 0.0
    %510 = vmatpush1.msra.mxu0 %v412
    %511 = vmatprep.subr.mxu0 0.0
    %512 = vmatpush1.msra.mxu0 %v413
    %513 = vmatprep.subr.mxu0 0.0
    %514 = vmatpush1.msra.mxu0 %v414
    %515 = vmatprep.subr.mxu0 0.0
    %516 = vmatpush1.msra.mxu0 %v415
    %517 = vmatprep.subr.mxu0 0.0
    %518 = vmatpush1.msra.mxu0 %v416
    %519 = vmatprep.subr.mxu0 0.0
    %520 = vmatpush1.msra.mxu0 %v417
    %521 = vmatprep.subr.mxu0 0.0
    %522 = vmatpush1.msra.mxu0 %v418
    %523 = vmatprep.subr.mxu0 0.0
    %524 = vmatpush1.msra.mxu0 %v419
    %525 = vmatprep.subr.mxu0 0.0
    %526 = vmatpush1.msra.mxu0 %v420
    %527 = vmatprep.subr.mxu0 0.0
    %528 = vmatpush1.msra.mxu0 %v421
    %529 = vmatprep.subr.mxu0 0.0
    %530 = vmatpush1.msra.mxu0 0.0
    %531 = vmatprep.subr.mxu0 0.0
    %532 = vmatpush1.msra.mxu0 0.0
    %533 = vmatprep.subr.mxu0 0.0
    %534 = vmatpush1.msra.mxu0 0.0
    %535 = vmatprep.subr.mxu0 0.0
    %536 = vmatpush1.msra.mxu0 0.0
    %537 = vmatprep.subr.mxu0 0.0
    %538 = vmatpush1.msra.mxu0 0.0
    %539 = vmatprep.subr.mxu0 0.0
    %540 = vmatpush1.msra.mxu0 0.0
    %541 = vmatprep.subr.mxu0 0.0
    %542 = vmatpush1.msra.mxu0 0.0
    %543 = vmatprep.subr.mxu0 0.0
    %544 = vmatpush1.msra.mxu0 0.0
    %545 = vmatprep.subr.mxu0 0.0
    %546 = vmatpush1.msra.mxu0 0.0
    %547 = vmatprep.subr.mxu0 0.0
    %548 = vmatpush1.msra.mxu0 0.0
    %549 = vmatprep.subr.mxu0 0.0
    %550 = vmatpush1.msra.mxu0 0.0
    %551 = vmatprep.subr.mxu0 0.0
    %552 = vmatpush1.msra.mxu0 0.0
    %553 = vmatprep.subr.mxu0 0.0
    %554 = vmatpush1.msra.mxu0 0.0
    %555 = vmatprep.subr.mxu0 0.0
    %556 = vmatpush1.msra.mxu0 0.0
    %557 = vmatprep.subr.mxu0 0.0
    %558 = vmatpush1.msra.mxu0 0.0
    %559 = vmatprep.subr.mxu0 0.0
    %560 = vmatpush1.msra.mxu0 0.0
    %561 = vmatprep.mubr.f32.mxu0 0.0
    %562 = vmatmul.mubr.f32.gmra.mrb[0].mxu0 %v426
    %v563 = vpop.f32.mrb[0].mxu0
    %v564 = vadd.f32 0.0, %v563
    %v565 = vpop.f32.mrb[0].mxu0
    %566 = vdwg.mxu0
    %v567 = vmul.f32 %v564, 1.442695
    %v568 = vpow.pop %v567
    %v570 = vlaneseq
    %v571 = vshrl.u32 %v570, 7
    %v572 = vsub.s32 0, %v571
    %v573 = vrot.slane %v422, %v572
    %v575 = vmul.f32 %v405, %v573
    %576 = vadd.xlane.f32.xlu0 %v575
    %v577 = vpop.xlane.xlu0 %576
    %v578 = vxor.u32 %v577, 2147483648
    %v579 = vmul.f32 %v578, 1.442695
    %v580 = vpow.pop %v579
    %v581 = vadd.f32 %v580, 1.0
    %v582 = vrcp.pop %v581
    %v583 = vmul.f32 1.0, %v582
    %v584 = vsub.f32 %v494, %v568
    %v585 = vmul.f32 %v583, %v584
    %v586 = vadd.f32 %v568, %v585
    %v587 = vsel %vm219, %v586, 0.0
    %588 = vst [vmem:[#allocation2] sm:$0xff] %v587
    // Predicated region
    $region30: #{n_layer_leaky_nac_forward.3} parent=1 // pred_check
      _
    $region31: #{n_layer_leaky_nac_forward.3} parent=1 // pred_check_branch
      %590 = sbr.rel (0) target = $region33
    $region32: #{n_layer_leaky_nac_forward.3} parent=1 // pred_region
      %s592 = ssub.s32 128, 128
      %593 = vsyncadd [#allocation3], %s592
      %s595 = sshll.u32 [#allocation2], 4
      %s596 = int_to_ptr.vmem [resolvable:$true] %s595
      %598 = dma.vmem_to_hbm [thread:$0]  %s596, 128, %s7, [#allocation3]
    $region33: #{n_layer_leaky_nac_forward.3} parent=1 // pred_fallthru
      _
    // Predicated region
    $region34: #{n_layer_leaky_nac_forward.3} parent=1 // pred_check
      _
    $region35: #{n_layer_leaky_nac_forward.3} parent=1 // pred_check_branch
      %600 = sbr.rel (0) target = $region37
    $region36: #{n_layer_leaky_nac_forward.3} parent=1 // pred_region
      %601 = dma.done [#allocation3], 128
    $region37: #{n_layer_leaky_nac_forward.3} parent=1 // pred_fallthru
      _
    %602 = vsyncpa [#allocation3], 1

</llo_original>
